<compile_context>
chip_gen: v5e
topology: v5e:2x2
jax: 0.10.0
libtpu: 0.0.40
codegen_flags: <defaults>
</compile_context>

<pallas_src>
import functools
from math import sqrt

import jax
import jax.numpy as jnp
from jax.experimental import pallas as pl
from jax.experimental.pallas import tpu as pltpu


def _round_up(x, m):
    return (x + m - 1) // m * m


def _choose_row_tile(length, cap=128):
    """Query-row tile: multiple of 8 (sublane), capped at 128 rows for VMEM."""
    if length <= cap:
        return _round_up(length, 8)
    return cap


# ---------------------------------------------------------------------------
# Fused kernel: QKV projections + per-head softmax attention + out projection
# ---------------------------------------------------------------------------
def _fused_attention_layer_kernel(q_in_ref, k_in_ref, v_in_ref,
                                  wq_ref, bq_ref, wk_ref, bk_ref,
                                  wv_ref, bv_ref, wo_ref, bo_ref,
                                  o_ref,
                                  q_scr, kt_scr, v_scr, ctx_scr,
                                  *, n_heads, d_k, d_v, scale):
    f32 = jnp.float32
    bf16 = jnp.bfloat16

    # ---- K/V projection: ONCE per batch row (l == 0), cached in VMEM scratch.
    # The L grid axis is "arbitrary", so this scratch stays valid across all
    # query-row tiles of the current batch element.
    @pl.when(pl.program_id(1) == 0)
    def _project_kv():
        xk = k_in_ref[...].astype(bf16)                                # (S, d_model)
        xv = v_in_ref[...].astype(bf16)
        k = jnp.dot(xk, wk_ref[...], preferred_element_type=f32) + bk_ref[...]
        v = jnp.dot(xv, wv_ref[...], preferred_element_type=f32) + bv_ref[...]
        # Store K transposed once -> no per-head transpose in the inner loop.
        kt_scr[...] = k.T.astype(bf16)                                 # (H*E, S)
        v_scr[...] = v.astype(bf16)                                    # (S, H*Dv)

    # ---- Q projection for this row tile; 1/sqrt(E) folded into Q (cheaper
    # than scaling the (tl, S) score matrix).
    xq = q_in_ref[...].astype(bf16)                                    # (tl, d_model)
    q = (jnp.dot(xq, wq_ref[...], preferred_element_type=f32)
         + bq_ref[...]) * scale
    q_scr[...] = q.astype(bf16)                                        # (tl, H*E)

    # ---- Per-head softmax attention.  Everything flows through VMEM scratch
    # (static slices -> zero-cost ref views), so only one head's (tl, S)
    # score/prob temporaries are live at a time.
    for h in range(n_heads):
        qh = q_scr[:, h * d_k:(h + 1) * d_k]                           # (tl, E)
        kth = kt_scr[h * d_k:(h + 1) * d_k, :]                         # (E, S)
        s = jnp.dot(qh, kth, preferred_element_type=f32)               # (tl, S)
        m = jnp.max(s, axis=-1, keepdims=True)
        p = jnp.exp(s - m)
        inv = pl.reciprocal(jnp.sum(p, axis=-1, keepdims=True), approx=True)
        a = (p * inv).astype(bf16)                                     # (tl, S)
        vh = v_scr[:, h * d_v:(h + 1) * d_v]                           # (S, Dv)
        ctx_scr[:, h * d_v:(h + 1) * d_v] = jnp.dot(
            a, vh, preferred_element_type=f32)                         # (tl, Dv)

    # ---- Single wide output projection: (tl, H*Dv) @ (H*Dv, d_model).
    # The ctx scratch slab IS the head concatenation.
    out = (jnp.dot(ctx_scr[...].astype(bf16), wo_ref[...],
                   preferred_element_type=f32) + bo_ref[...])
    o_ref[...] = out.astype(o_ref.dtype)


# ---------------------------------------------------------------------------
# AttentionLayer forward (single pallas_call)
# ---------------------------------------------------------------------------
def attention_layer_forward(queries, keys, values, attn_mask, params, n_heads,
                            mix=False):
    if attn_mask is not None:
        # TODO(synk): masked-softmax path for mask_flag=True inner attentions.
        raise NotImplementedError(
            "attn_mask is not supported: inner attention is FullAttention "
            "with mask_flag=False")
    if mix:
        # TODO(synk): mix=True head/sequence re-interleave before out proj.
        raise NotImplementedError("mix=True is not supported")

    B, L, d_model = queries.shape
    S = keys.shape[1]
    H = n_heads
    hk = params["wq"].shape[1]          # H * d_k
    hv = params["wv"].shape[1]          # H * d_v
    d_k = hk // H
    d_v = hv // H
    d_out = params["wo"].shape[1]
    scale = 1.0 / sqrt(d_k)

    # Row tiling: pad L up to a multiple of the tile instead of hunting for an
    # exact divisor (avoids tl=8/16 degenerate tiles and full-L VMEM blowups).
    tl = _choose_row_tile(L)
    L_pad = _round_up(L, tl)
    q_in = queries
    if L_pad != L:
        q_in = jnp.pad(queries, ((0, 0), (0, L_pad - L), (0, 0)))

    grid = (B, L_pad // tl)

    # Weights cast to bf16 host-side (fast MXU path on all chips, half the
    # resident VMEM); biases stay f32 and are added to f32 accumulators.
    bf16 = jnp.bfloat16
    wq = params["wq"].astype(bf16)
    wk = params["wk"].astype(bf16)
    wv = params["wv"].astype(bf16)
    wo = params["wo"].astype(bf16)
    bq = params["bq"].reshape(1, hk).astype(jnp.float32)
    bk = params["bk"].reshape(1, hk).astype(jnp.float32)
    bv = params["bv"].reshape(1, hv).astype(jnp.float32)
    bo = params["bo"].reshape(1, d_out).astype(jnp.float32)

    kernel = functools.partial(
        _fused_attention_layer_kernel,
        n_heads=H, d_k=d_k, d_v=d_v, scale=scale)

    # Advisory cost estimate (4 projections + attention matmuls + exps).
    flops = 2 * B * (L_pad * d_model * hk           # Q proj
                     + S * d_model * hk             # K proj (once per b)
                     + S * d_model * hv             # V proj (once per b)
                     + H * L_pad * S * (d_k + d_v)  # QK^T and A@V
                     + L_pad * hv * d_out)          # out proj
    transcendentals = B * H * L_pad * S
    bytes_accessed = int(
        4 * (queries.size + keys.size + values.size)
        + 2 * (wq.size + wk.size + wv.size + wo.size)
        + 4 * (bq.size + bk.size + bv.size + bo.size)
        + 4 * B * L_pad * d_out)

    out = pl.pallas_call(
        kernel,
        out_shape=jax.ShapeDtypeStruct((B, L_pad, d_out), queries.dtype),
        grid=grid,
        in_specs=[
            # activations: one (tl, d_model) query tile; full K/V rows per batch
            pl.BlockSpec((None, tl, d_model), lambda b, l: (b, l, 0)),
            pl.BlockSpec((None, S, d_model), lambda b, l: (b, 0, 0)),
            pl.BlockSpec((None, S, d_model), lambda b, l: (b, 0, 0)),
            # weights / biases: constant index_map -> stay resident in VMEM
            pl.BlockSpec((d_model, hk), lambda b, l: (0, 0)),   # wq (bf16)
            pl.BlockSpec((1, hk), lambda b, l: (0, 0)),         # bq
            pl.BlockSpec((d_model, hk), lambda b, l: (0, 0)),   # wk (bf16)
            pl.BlockSpec((1, hk), lambda b, l: (0, 0)),         # bk
            pl.BlockSpec((d_model, hv), lambda b, l: (0, 0)),   # wv (bf16)
            pl.BlockSpec((1, hv), lambda b, l: (0, 0)),         # bv
            pl.BlockSpec((hv, d_out), lambda b, l: (0, 0)),     # wo (bf16)
            pl.BlockSpec((1, d_out), lambda b, l: (0, 0)),      # bo
        ],
        out_specs=pl.BlockSpec((None, tl, d_out), lambda b, l: (b, l, 0)),
        scratch_shapes=[
            pltpu.VMEM((tl, hk), bf16),          # projected Q (scaled)
            pltpu.VMEM((hk, S), bf16),           # projected K, transposed
            pltpu.VMEM((S, hv), bf16),           # projected V
            pltpu.VMEM((tl, hv), jnp.float32),   # ctx slab (head concat)
        ],
        compiler_params=pltpu.CompilerParams(
            # L axis must be sequential (K/V scratch cached across it);
            # batch stays parallel so both v7x TensorCores get work when B>=2.
            dimension_semantics=("parallel", "arbitrary"),
            vmem_limit_bytes=48 * 1024 * 1024,
        ),
        cost_estimate=pl.CostEstimate(
            flops=int(flops),
            transcendentals=int(transcendentals),
            bytes_accessed=bytes_accessed),
    )(
        q_in, keys, values,
        wq, bq, wk, bk, wv, bv, wo, bo,
    )
    if L_pad != L:
        out = out[:, :L, :]
    return out, None   # output_attention=False -> attn is None


# ---------------------------------------------------------------------------
# Pure-JAX reference for the correctness check
# ---------------------------------------------------------------------------
def reference_forward(queries, keys, values, params, n_heads):
    B, L, d_model = queries.shape
    S = keys.shape[1]
    H = n_heads
    q = queries @ params["wq"] + params["bq"]
    k = keys @ params["wk"] + params["bk"]
    v = values @ params["wv"] + params["bv"]
    E = q.shape[-1] // H
    Dv = v.shape[-1] // H
    q = q.reshape(B, L, H, E)
    k = k.reshape(B, S, H, E)
    v = v.reshape(B, S, H, Dv)
    scores = jnp.einsum("blhe,bshe->bhls", q, k) * (1.0 / sqrt(E))
    a = jax.nn.softmax(scores, axis=-1)
    o = jnp.einsum("bhls,bshd->blhd", a, v).reshape(B, L, H * Dv)
    return o @ params["wo"] + params["bo"]


# ---------------------------------------------------------------------------
if __name__ == "__main__":
    B, L, S = 2, 8, 8
    d_model, n_heads = 32, 4
    d_keys = d_model // n_heads
    d_values = d_model // n_heads
    dtype = jnp.float32

    key = jax.random.PRNGKey(0)
    ks = jax.random.split(key, 11)

    def init_linear(kw, kb, d_in, d_out):
        bound = 1.0 / sqrt(d_in)
        w = jax.random.uniform(kw, (d_in, d_out), dtype, -bound, bound)
        b = jax.random.uniform(kb, (d_out,), dtype, -bound, bound)
        return w, b

    wq, bq = init_linear(ks[0], ks[1], d_model, d_keys * n_heads)
    wk, bk = init_linear(ks[2], ks[3], d_model, d_keys * n_heads)
    wv, bv = init_linear(ks[4], ks[5], d_model, d_values * n_heads)
    wo, bo = init_linear(ks[6], ks[7], d_values * n_heads, d_model)
    params = dict(wq=wq, bq=bq, wk=wk, bk=bk, wv=wv, bv=bv, wo=wo, bo=bo)

    queries = jax.random.normal(ks[8], (B, L, d_model), dtype)
    keys = jax.random.normal(ks[9], (B, S, d_model), dtype)
    values = jax.random.normal(ks[10], (B, S, d_model), dtype)

    # bf16 MXU operands + approx reciprocal -> loosened tolerance (perf review).
    TOL = 2e-2

    out, attn = attention_layer_forward(
        queries, keys, values, None, params, n_heads, mix=False)
    out = jax.block_until_ready(out)
    ref = reference_forward(queries, keys, values, params, n_heads)
    assert out.shape == (B, L, d_model)
    assert attn is None
    err = jnp.max(jnp.abs(out - ref))
    assert err < TOL, f"mismatch vs pure-JAX reference: {err}"

    # Second small check exercising the L-padding path (L not a multiple of 8).
    L2 = 12
    q2 = jax.random.normal(jax.random.PRNGKey(1), (B, L2, d_model), dtype)
    out2, _ = attention_layer_forward(
        q2, keys, values, None, params, n_heads, mix=False)
    out2 = jax.block_until_ready(out2)
    ref2 = reference_forward(q2, keys, values, params, n_heads)
    assert out2.shape == (B, L2, d_model)
    err2 = jnp.max(jnp.abs(out2 - ref2))
    assert err2 < TOL, f"padded-L mismatch vs pure-JAX reference: {err2}"

    print("KERNEL_OK")
</pallas_src>

<mosaic_0001>
module attributes {stable_mosaic.version = 11 : i64} {
  func.func @_fused_attention_layer_kernel(%arg0: i32, %arg1: i32, %arg2: memref<1x8x32xf32, #tpu.memory_space<vmem>>, %arg3: memref<1x8x32xf32, #tpu.memory_space<vmem>>, %arg4: memref<1x8x32xf32, #tpu.memory_space<vmem>>, %arg5: memref<32x32xbf16, #tpu.memory_space<vmem>>, %arg6: memref<1x32xf32, #tpu.memory_space<vmem>>, %arg7: memref<32x32xbf16, #tpu.memory_space<vmem>>, %arg8: memref<1x32xf32, #tpu.memory_space<vmem>>, %arg9: memref<32x32xbf16, #tpu.memory_space<vmem>>, %arg10: memref<1x32xf32, #tpu.memory_space<vmem>>, %arg11: memref<32x32xbf16, #tpu.memory_space<vmem>>, %arg12: memref<1x32xf32, #tpu.memory_space<vmem>>, %arg13: memref<1x8x32xf32, #tpu.memory_space<vmem>>, %arg14: memref<8x32xbf16, #tpu.memory_space<vmem>>, %arg15: memref<32x8xbf16, #tpu.memory_space<vmem>>, %arg16: memref<8x32xbf16, #tpu.memory_space<vmem>>, %arg17: memref<8x32xf32, #tpu.memory_space<vmem>>) attributes {dimension_semantics = [#tpu.dimension_semantics<parallel>, #tpu.dimension_semantics<arbitrary>], iteration_bounds = array<i64: 2, 1>, scalar_prefetch = 0 : i64, scratch_operands = 4 : i64, tpu.core_type = #tpu.core_type<tc>, window_params = [{transform_indices = @transform_0, window_bounds = array<i64: 1, 8, 32>}, {transform_indices = @transform_1, window_bounds = array<i64: 1, 8, 32>}, {transform_indices = @transform_2, window_bounds = array<i64: 1, 8, 32>}, {pipeline_mode = #tpu.pipeline_mode<synchronous>, transform_indices = @transform_3, window_bounds = array<i64: 32, 32>}, {pipeline_mode = #tpu.pipeline_mode<synchronous>, transform_indices = @transform_4, window_bounds = array<i64: 1, 32>}, {pipeline_mode = #tpu.pipeline_mode<synchronous>, transform_indices = @transform_5, window_bounds = array<i64: 32, 32>}, {pipeline_mode = #tpu.pipeline_mode<synchronous>, transform_indices = @transform_6, window_bounds = array<i64: 1, 32>}, {pipeline_mode = #tpu.pipeline_mode<synchronous>, transform_indices = @transform_7, window_bounds = array<i64: 32, 32>}, {pipeline_mode = #tpu.pipeline_mode<synchronous>, transform_indices = @transform_8, window_bounds = array<i64: 1, 32>}, {pipeline_mode = #tpu.pipeline_mode<synchronous>, transform_indices = @transform_9, window_bounds = array<i64: 32, 32>}, {pipeline_mode = #tpu.pipeline_mode<synchronous>, transform_indices = @transform_10, window_bounds = array<i64: 1, 32>}, {transform_indices = @transform_11, window_bounds = array<i64: 1, 8, 32>}]} {
    %c0_i32 = arith.constant 0 : i32
    %0 = arith.cmpi eq, %arg1, %c0_i32 : i32
    %1 = arith.extui %0 : i1 to i32
    %c0_i32_0 = arith.constant 0 : i32
    %2 = arith.cmpi ne, %1, %c0_i32_0 : i32
    scf.if %2 {
      %c0_65 = arith.constant 0 : index
      %c0_66 = arith.constant 0 : index
      %c0_67 = arith.constant 0 : index
      %93 = vector.load %arg3[%c0_65, %c0_66, %c0_67] : memref<1x8x32xf32, #tpu.memory_space<vmem>>, vector<1x8x32xf32>
      %94 = vector.shape_cast %93 : vector<1x8x32xf32> to vector<8x32xf32>
      %95 = arith.truncf %94 : vector<8x32xf32> to vector<8x32xbf16>
      %c0_68 = arith.constant 0 : index
      %c0_69 = arith.constant 0 : index
      %c0_70 = arith.constant 0 : index
      %96 = vector.load %arg4[%c0_68, %c0_69, %c0_70] : memref<1x8x32xf32, #tpu.memory_space<vmem>>, vector<1x8x32xf32>
      %97 = vector.shape_cast %96 : vector<1x8x32xf32> to vector<8x32xf32>
      %98 = arith.truncf %97 : vector<8x32xf32> to vector<8x32xbf16>
      %c0_71 = arith.constant 0 : index
      %c0_72 = arith.constant 0 : index
      %99 = vector.load %arg7[%c0_71, %c0_72] : memref<32x32xbf16, #tpu.memory_space<vmem>>, vector<32x32xbf16>
      %cst_73 = arith.constant dense<0.000000e+00> : vector<8x32xf32>
      %100 = tpu.matmul %95, %99, %cst_73 {dimension_numbers = #tpu.dot_dimension_numbers<[1], [0], [0], [1], [0, 0, 1, 1], [], []>} : vector<8x32xbf16>, vector<32x32xbf16>, vector<8x32xf32> -> vector<8x32xf32>
      %c0_74 = arith.constant 0 : index
      %c0_75 = arith.constant 0 : index
      %101 = vector.load %arg8[%c0_74, %c0_75] : memref<1x32xf32, #tpu.memory_space<vmem>>, vector<1x32xf32>
      %102 = vector.broadcast %101 : vector<1x32xf32> to vector<8x32xf32>
      %103 = arith.addf %100, %102 : vector<8x32xf32>
      %c0_76 = arith.constant 0 : index
      %c0_77 = arith.constant 0 : index
      %104 = vector.load %arg9[%c0_76, %c0_77] : memref<32x32xbf16, #tpu.memory_space<vmem>>, vector<32x32xbf16>
      %cst_78 = arith.constant dense<0.000000e+00> : vector<8x32xf32>
      %105 = tpu.matmul %98, %104, %cst_78 {dimension_numbers = #tpu.dot_dimension_numbers<[1], [0], [0], [1], [0, 0, 1, 1], [], []>} : vector<8x32xbf16>, vector<32x32xbf16>, vector<8x32xf32> -> vector<8x32xf32>
      %c0_79 = arith.constant 0 : index
      %c0_80 = arith.constant 0 : index
      %106 = vector.load %arg10[%c0_79, %c0_80] : memref<1x32xf32, #tpu.memory_space<vmem>>, vector<1x32xf32>
      %107 = vector.broadcast %106 : vector<1x32xf32> to vector<8x32xf32>
      %108 = arith.addf %105, %107 : vector<8x32xf32>
      %109 = tpu.transpose %103, [1, 0] : vector<8x32xf32> -> vector<32x8xf32>
      %110 = arith.truncf %109 : vector<32x8xf32> to vector<32x8xbf16>
      %c0_81 = arith.constant 0 : index
      %c0_82 = arith.constant 0 : index
      %111 = vector.load %arg15[%c0_81, %c0_82] : memref<32x8xbf16, #tpu.memory_space<vmem>>, vector<32x8xbf16>
      tpu.vector_store %arg15[%c0_81, %c0_82], %110 {strides = array<i32>} : memref<32x8xbf16, #tpu.memory_space<vmem>>, vector<32x8xbf16>,
      %112 = arith.truncf %108 : vector<8x32xf32> to vector<8x32xbf16>
      %c0_83 = arith.constant 0 : index
      %c0_84 = arith.constant 0 : index
      %113 = vector.load %arg16[%c0_83, %c0_84] : memref<8x32xbf16, #tpu.memory_space<vmem>>, vector<8x32xbf16>
      tpu.vector_store %arg16[%c0_83, %c0_84], %112 {strides = array<i32>} : memref<8x32xbf16, #tpu.memory_space<vmem>>, vector<8x32xbf16>,
    } else {
    }
    %c0 = arith.constant 0 : index
    %c0_1 = arith.constant 0 : index
    %c0_2 = arith.constant 0 : index
    %3 = vector.load %arg2[%c0, %c0_1, %c0_2] : memref<1x8x32xf32, #tpu.memory_space<vmem>>, vector<1x8x32xf32>
    %4 = vector.shape_cast %3 : vector<1x8x32xf32> to vector<8x32xf32>
    %5 = arith.truncf %4 : vector<8x32xf32> to vector<8x32xbf16>
    %c0_3 = arith.constant 0 : index
    %c0_4 = arith.constant 0 : index
    %6 = vector.load %arg5[%c0_3, %c0_4] : memref<32x32xbf16, #tpu.memory_space<vmem>>, vector<32x32xbf16>
    %cst = arith.constant dense<0.000000e+00> : vector<8x32xf32>
    %7 = tpu.matmul %5, %6, %cst {dimension_numbers = #tpu.dot_dimension_numbers<[1], [0], [0], [1], [0, 0, 1, 1], [], []>} : vector<8x32xbf16>, vector<32x32xbf16>, vector<8x32xf32> -> vector<8x32xf32>
    %c0_5 = arith.constant 0 : index
    %c0_6 = arith.constant 0 : index
    %8 = vector.load %arg6[%c0_5, %c0_6] : memref<1x32xf32, #tpu.memory_space<vmem>>, vector<1x32xf32>
    %9 = vector.broadcast %8 : vector<1x32xf32> to vector<8x32xf32>
    %10 = arith.addf %7, %9 : vector<8x32xf32>
    %cst_7 = arith.constant 0.353553385 : f32
    %11 = vector.broadcast %cst_7 : f32 to vector<8x32xf32>
    %12 = arith.mulf %10, %11 : vector<8x32xf32>
    %13 = arith.truncf %12 : vector<8x32xf32> to vector<8x32xbf16>
    %c0_8 = arith.constant 0 : index
    %c0_9 = arith.constant 0 : index
    %14 = vector.load %arg14[%c0_8, %c0_9] : memref<8x32xbf16, #tpu.memory_space<vmem>>, vector<8x32xbf16>
    tpu.vector_store %arg14[%c0_8, %c0_9], %13 {strides = array<i32>} : memref<8x32xbf16, #tpu.memory_space<vmem>>, vector<8x32xbf16>,
    %c0_10 = arith.constant 0 : index
    %c0_11 = arith.constant 0 : index
    %15 = vector.load %arg14[%c0_10, %c0_11] : memref<8x32xbf16, #tpu.memory_space<vmem>>, vector<8x8xbf16>
    %c0_12 = arith.constant 0 : index
    %c0_13 = arith.constant 0 : index
    %16 = vector.load %arg15[%c0_12, %c0_13] : memref<32x8xbf16, #tpu.memory_space<vmem>>, vector<8x8xbf16>
    %cst_14 = arith.constant dense<0.000000e+00> : vector<8x8xf32>
    %17 = tpu.matmul %15, %16, %cst_14 {dimension_numbers = #tpu.dot_dimension_numbers<[1], [0], [0], [1], [0, 0, 1, 1], [], []>} : vector<8x8xbf16>, vector<8x8xbf16>, vector<8x8xf32> -> vector<8x8xf32>
    %cst_15 = arith.constant dense<0xFF800000> : vector<8xf32>
    %18 = vector.multi_reduction <maximumf>, %17, %cst_15 [1] : vector<8x8xf32> to vector<8xf32>
    %19 = vector.shape_cast %18 : vector<8xf32> to vector<8x1xf32>
    %20 = vector.broadcast %19 : vector<8x1xf32> to vector<8x8xf32>
    %21 = arith.subf %17, %20 : vector<8x8xf32>
    %22 = math.exp %21 : vector<8x8xf32>
    %cst_16 = arith.constant dense<0.000000e+00> : vector<8xf32>
    %23 = vector.multi_reduction <add>, %22, %cst_16 [1] : vector<8x8xf32> to vector<8xf32>
    %24 = vector.shape_cast %23 : vector<8xf32> to vector<8x1xf32>
    %25 = tpu.reciprocal %24 {approx = true} : vector<8x1xf32> -> vector<8x1xf32>
    %26 = vector.broadcast %25 : vector<8x1xf32> to vector<8x8xf32>
    %27 = arith.mulf %22, %26 : vector<8x8xf32>
    %28 = arith.truncf %27 : vector<8x8xf32> to vector<8x8xbf16>
    %c0_17 = arith.constant 0 : index
    %c0_18 = arith.constant 0 : index
    %29 = vector.load %arg16[%c0_17, %c0_18] : memref<8x32xbf16, #tpu.memory_space<vmem>>, vector<8x8xbf16>
    %cst_19 = arith.constant dense<0.000000e+00> : vector<8x8xf32>
    %30 = tpu.matmul %28, %29, %cst_19 {dimension_numbers = #tpu.dot_dimension_numbers<[1], [0], [0], [1], [0, 0, 1, 1], [], []>} : vector<8x8xbf16>, vector<8x8xbf16>, vector<8x8xf32> -> vector<8x8xf32>
    %c0_20 = arith.constant 0 : index
    %c0_21 = arith.constant 0 : index
    %31 = vector.load %arg17[%c0_20, %c0_21] : memref<8x32xf32, #tpu.memory_space<vmem>>, vector<8x8xf32>
    tpu.vector_store %arg17[%c0_20, %c0_21], %30 {strides = array<i32>} : memref<8x32xf32, #tpu.memory_space<vmem>>, vector<8x8xf32>,
    %c0_22 = arith.constant 0 : index
    %c8 = arith.constant 8 : index
    %32 = vector.load %arg14[%c0_22, %c8] : memref<8x32xbf16, #tpu.memory_space<vmem>>, vector<8x8xbf16>
    %c8_23 = arith.constant 8 : index
    %c0_24 = arith.constant 0 : index
    %33 = vector.load %arg15[%c8_23, %c0_24] : memref<32x8xbf16, #tpu.memory_space<vmem>>, vector<8x8xbf16>
    %cst_25 = arith.constant dense<0.000000e+00> : vector<8x8xf32>
    %34 = tpu.matmul %32, %33, %cst_25 {dimension_numbers = #tpu.dot_dimension_numbers<[1], [0], [0], [1], [0, 0, 1, 1], [], []>} : vector<8x8xbf16>, vector<8x8xbf16>, vector<8x8xf32> -> vector<8x8xf32>
    %cst_26 = arith.constant dense<0xFF800000> : vector<8xf32>
    %35 = vector.multi_reduction <maximumf>, %34, %cst_26 [1] : vector<8x8xf32> to vector<8xf32>
    %36 = vector.shape_cast %35 : vector<8xf32> to vector<8x1xf32>
    %37 = vector.broadcast %36 : vector<8x1xf32> to vector<8x8xf32>
    %38 = arith.subf %34, %37 : vector<8x8xf32>
    %39 = math.exp %38 : vector<8x8xf32>
    %cst_27 = arith.constant dense<0.000000e+00> : vector<8xf32>
    %40 = vector.multi_reduction <add>, %39, %cst_27 [1] : vector<8x8xf32> to vector<8xf32>
    %41 = vector.shape_cast %40 : vector<8xf32> to vector<8x1xf32>
    %42 = tpu.reciprocal %41 {approx = true} : vector<8x1xf32> -> vector<8x1xf32>
    %43 = vector.broadcast %42 : vector<8x1xf32> to vector<8x8xf32>
    %44 = arith.mulf %39, %43 : vector<8x8xf32>
    %45 = arith.truncf %44 : vector<8x8xf32> to vector<8x8xbf16>
    %c0_28 = arith.constant 0 : index
    %c8_29 = arith.constant 8 : index
    %46 = vector.load %arg16[%c0_28, %c8_29] : memref<8x32xbf16, #tpu.memory_space<vmem>>, vector<8x8xbf16>
    %cst_30 = arith.constant dense<0.000000e+00> : vector<8x8xf32>
    %47 = tpu.matmul %45, %46, %cst_30 {dimension_numbers = #tpu.dot_dimension_numbers<[1], [0], [0], [1], [0, 0, 1, 1], [], []>} : vector<8x8xbf16>, vector<8x8xbf16>, vector<8x8xf32> -> vector<8x8xf32>
    %c0_31 = arith.constant 0 : index
    %c8_32 = arith.constant 8 : index
    %48 = vector.load %arg17[%c0_31, %c8_32] : memref<8x32xf32, #tpu.memory_space<vmem>>, vector<8x8xf32>
    tpu.vector_store %arg17[%c0_31, %c8_32], %47 {strides = array<i32>} : memref<8x32xf32, #tpu.memory_space<vmem>>, vector<8x8xf32>,
    %c0_33 = arith.constant 0 : index
    %c16 = arith.constant 16 : index
    %49 = vector.load %arg14[%c0_33, %c16] : memref<8x32xbf16, #tpu.memory_space<vmem>>, vector<8x8xbf16>
    %c16_34 = arith.constant 16 : index
    %c0_35 = arith.constant 0 : index
    %50 = vector.load %arg15[%c16_34, %c0_35] : memref<32x8xbf16, #tpu.memory_space<vmem>>, vector<8x8xbf16>
    %cst_36 = arith.constant dense<0.000000e+00> : vector<8x8xf32>
    %51 = tpu.matmul %49, %50, %cst_36 {dimension_numbers = #tpu.dot_dimension_numbers<[1], [0], [0], [1], [0, 0, 1, 1], [], []>} : vector<8x8xbf16>, vector<8x8xbf16>, vector<8x8xf32> -> vector<8x8xf32>
    %cst_37 = arith.constant dense<0xFF800000> : vector<8xf32>
    %52 = vector.multi_reduction <maximumf>, %51, %cst_37 [1] : vector<8x8xf32> to vector<8xf32>
    %53 = vector.shape_cast %52 : vector<8xf32> to vector<8x1xf32>
    %54 = vector.broadcast %53 : vector<8x1xf32> to vector<8x8xf32>
    %55 = arith.subf %51, %54 : vector<8x8xf32>
    %56 = math.exp %55 : vector<8x8xf32>
    %cst_38 = arith.constant dense<0.000000e+00> : vector<8xf32>
    %57 = vector.multi_reduction <add>, %56, %cst_38 [1] : vector<8x8xf32> to vector<8xf32>
    %58 = vector.shape_cast %57 : vector<8xf32> to vector<8x1xf32>
    %59 = tpu.reciprocal %58 {approx = true} : vector<8x1xf32> -> vector<8x1xf32>
    %60 = vector.broadcast %59 : vector<8x1xf32> to vector<8x8xf32>
    %61 = arith.mulf %56, %60 : vector<8x8xf32>
    %62 = arith.truncf %61 : vector<8x8xf32> to vector<8x8xbf16>
    %c0_39 = arith.constant 0 : index
    %c16_40 = arith.constant 16 : index
    %63 = vector.load %arg16[%c0_39, %c16_40] : memref<8x32xbf16, #tpu.memory_space<vmem>>, vector<8x8xbf16>
    %cst_41 = arith.constant dense<0.000000e+00> : vector<8x8xf32>
    %64 = tpu.matmul %62, %63, %cst_41 {dimension_numbers = #tpu.dot_dimension_numbers<[1], [0], [0], [1], [0, 0, 1, 1], [], []>} : vector<8x8xbf16>, vector<8x8xbf16>, vector<8x8xf32> -> vector<8x8xf32>
    %c0_42 = arith.constant 0 : index
    %c16_43 = arith.constant 16 : index
    %65 = vector.load %arg17[%c0_42, %c16_43] : memref<8x32xf32, #tpu.memory_space<vmem>>, vector<8x8xf32>
    tpu.vector_store %arg17[%c0_42, %c16_43], %64 {strides = array<i32>} : memref<8x32xf32, #tpu.memory_space<vmem>>, vector<8x8xf32>,
    %c0_44 = arith.constant 0 : index
    %c24 = arith.constant 24 : index
    %66 = vector.load %arg14[%c0_44, %c24] : memref<8x32xbf16, #tpu.memory_space<vmem>>, vector<8x8xbf16>
    %c24_45 = arith.constant 24 : index
    %c0_46 = arith.constant 0 : index
    %67 = vector.load %arg15[%c24_45, %c0_46] : memref<32x8xbf16, #tpu.memory_space<vmem>>, vector<8x8xbf16>
    %cst_47 = arith.constant dense<0.000000e+00> : vector<8x8xf32>
    %68 = tpu.matmul %66, %67, %cst_47 {dimension_numbers = #tpu.dot_dimension_numbers<[1], [0], [0], [1], [0, 0, 1, 1], [], []>} : vector<8x8xbf16>, vector<8x8xbf16>, vector<8x8xf32> -> vector<8x8xf32>
    %cst_48 = arith.constant dense<0xFF800000> : vector<8xf32>
    %69 = vector.multi_reduction <maximumf>, %68, %cst_48 [1] : vector<8x8xf32> to vector<8xf32>
    %70 = vector.shape_cast %69 : vector<8xf32> to vector<8x1xf32>
    %71 = vector.broadcast %70 : vector<8x1xf32> to vector<8x8xf32>
    %72 = arith.subf %68, %71 : vector<8x8xf32>
    %73 = math.exp %72 : vector<8x8xf32>
    %cst_49 = arith.constant dense<0.000000e+00> : vector<8xf32>
    %74 = vector.multi_reduction <add>, %73, %cst_49 [1] : vector<8x8xf32> to vector<8xf32>
    %75 = vector.shape_cast %74 : vector<8xf32> to vector<8x1xf32>
    %76 = tpu.reciprocal %75 {approx = true} : vector<8x1xf32> -> vector<8x1xf32>
    %77 = vector.broadcast %76 : vector<8x1xf32> to vector<8x8xf32>
    %78 = arith.mulf %73, %77 : vector<8x8xf32>
    %79 = arith.truncf %78 : vector<8x8xf32> to vector<8x8xbf16>
    %c0_50 = arith.constant 0 : index
    %c24_51 = arith.constant 24 : index
    %80 = vector.load %arg16[%c0_50, %c24_51] : memref<8x32xbf16, #tpu.memory_space<vmem>>, vector<8x8xbf16>
    %cst_52 = arith.constant dense<0.000000e+00> : vector<8x8xf32>
    %81 = tpu.matmul %79, %80, %cst_52 {dimension_numbers = #tpu.dot_dimension_numbers<[1], [0], [0], [1], [0, 0, 1, 1], [], []>} : vector<8x8xbf16>, vector<8x8xbf16>, vector<8x8xf32> -> vector<8x8xf32>
    %c0_53 = arith.constant 0 : index
    %c24_54 = arith.constant 24 : index
    %82 = vector.load %arg17[%c0_53, %c24_54] : memref<8x32xf32, #tpu.memory_space<vmem>>, vector<8x8xf32>
    tpu.vector_store %arg17[%c0_53, %c24_54], %81 {strides = array<i32>} : memref<8x32xf32, #tpu.memory_space<vmem>>, vector<8x8xf32>,
    %c0_55 = arith.constant 0 : index
    %c0_56 = arith.constant 0 : index
    %83 = vector.load %arg17[%c0_55, %c0_56] : memref<8x32xf32, #tpu.memory_space<vmem>>, vector<8x32xf32>
    %84 = arith.truncf %83 : vector<8x32xf32> to vector<8x32xbf16>
    %c0_57 = arith.constant 0 : index
    %c0_58 = arith.constant 0 : index
    %85 = vector.load %arg11[%c0_57, %c0_58] : memref<32x32xbf16, #tpu.memory_space<vmem>>, vector<32x32xbf16>
    %cst_59 = arith.constant dense<0.000000e+00> : vector<8x32xf32>
    %86 = tpu.matmul %84, %85, %cst_59 {dimension_numbers = #tpu.dot_dimension_numbers<[1], [0], [0], [1], [0, 0, 1, 1], [], []>} : vector<8x32xbf16>, vector<32x32xbf16>, vector<8x32xf32> -> vector<8x32xf32>
    %c0_60 = arith.constant 0 : index
    %c0_61 = arith.constant 0 : index
    %87 = vector.load %arg12[%c0_60, %c0_61] : memref<1x32xf32, #tpu.memory_space<vmem>>, vector<1x32xf32>
    %88 = vector.broadcast %87 : vector<1x32xf32> to vector<8x32xf32>
    %89 = arith.addf %86, %88 : vector<8x32xf32>
    %c0_62 = arith.constant 0 : index
    %c0_63 = arith.constant 0 : index
    %c0_64 = arith.constant 0 : index
    %90 = vector.load %arg13[%c0_62, %c0_63, %c0_64] : memref<1x8x32xf32, #tpu.memory_space<vmem>>, vector<1x8x32xf32>
    %91 = vector.shape_cast %90 : vector<1x8x32xf32> to vector<8x32xf32>
    %92 = vector.shape_cast %89 : vector<8x32xf32> to vector<1x8x32xf32>
    tpu.vector_store %arg13[%c0_62, %c0_63, %c0_64], %92 {strides = array<i32>} : memref<1x8x32xf32, #tpu.memory_space<vmem>>, vector<1x8x32xf32>,
    return
  }
  func.func @transform_0(%arg0: i32, %arg1: i32) -> (i32, i32, i32) {
    %c0_i32 = arith.constant 0 : i32
    %c0_i32_0 = arith.constant 0 : i32
    return %arg0, %arg1, %c0_i32 : i32, i32, i32
  }
  func.func @transform_1(%arg0: i32, %arg1: i32) -> (i32, i32, i32) {
    %c0_i32 = arith.constant 0 : i32
    %c0_i32_0 = arith.constant 0 : i32
    %c0_i32_1 = arith.constant 0 : i32
    return %arg0, %c0_i32, %c0_i32_0 : i32, i32, i32
  }
  func.func @transform_2(%arg0: i32, %arg1: i32) -> (i32, i32, i32) {
    %c0_i32 = arith.constant 0 : i32
    %c0_i32_0 = arith.constant 0 : i32
    %c0_i32_1 = arith.constant 0 : i32
    return %arg0, %c0_i32, %c0_i32_0 : i32, i32, i32
  }
  func.func @transform_3(%arg0: i32, %arg1: i32) -> (i32, i32) {
    %c0_i32 = arith.constant 0 : i32
    %c0_i32_0 = arith.constant 0 : i32
    %c0_i32_1 = arith.constant 0 : i32
    return %c0_i32, %c0_i32_0 : i32, i32
  }
  func.func @transform_4(%arg0: i32, %arg1: i32) -> (i32, i32) {
    %c0_i32 = arith.constant 0 : i32
    %c0_i32_0 = arith.constant 0 : i32
    %c0_i32_1 = arith.constant 0 : i32
    return %c0_i32, %c0_i32_0 : i32, i32
  }
  func.func @transform_5(%arg0: i32, %arg1: i32) -> (i32, i32) {
    %c0_i32 = arith.constant 0 : i32
    %c0_i32_0 = arith.constant 0 : i32
    %c0_i32_1 = arith.constant 0 : i32
    return %c0_i32, %c0_i32_0 : i32, i32
  }
  func.func @transform_6(%arg0: i32, %arg1: i32) -> (i32, i32) {
    %c0_i32 = arith.constant 0 : i32
    %c0_i32_0 = arith.constant 0 : i32
    %c0_i32_1 = arith.constant 0 : i32
    return %c0_i32, %c0_i32_0 : i32, i32
  }
  func.func @transform_7(%arg0: i32, %arg1: i32) -> (i32, i32) {
    %c0_i32 = arith.constant 0 : i32
    %c0_i32_0 = arith.constant 0 : i32
    %c0_i32_1 = arith.constant 0 : i32
    return %c0_i32, %c0_i32_0 : i32, i32
  }
  func.func @transform_8(%arg0: i32, %arg1: i32) -> (i32, i32) {
    %c0_i32 = arith.constant 0 : i32
    %c0_i32_0 = arith.constant 0 : i32
    %c0_i32_1 = arith.constant 0 : i32
    return %c0_i32, %c0_i32_0 : i32, i32
  }
  func.func @transform_9(%arg0: i32, %arg1: i32) -> (i32, i32) {
    %c0_i32 = arith.constant 0 : i32
    %c0_i32_0 = arith.constant 0 : i32
    %c0_i32_1 = arith.constant 0 : i32
    return %c0_i32, %c0_i32_0 : i32, i32
  }
  func.func @transform_10(%arg0: i32, %arg1: i32) -> (i32, i32) {
    %c0_i32 = arith.constant 0 : i32
    %c0_i32_0 = arith.constant 0 : i32
    %c0_i32_1 = arith.constant 0 : i32
    return %c0_i32, %c0_i32_0 : i32, i32
  }
  func.func @transform_11(%arg0: i32, %arg1: i32) -> (i32, i32, i32) {
    %c0_i32 = arith.constant 0 : i32
    %c0_i32_0 = arith.constant 0 : i32
    return %arg0, %arg1, %c0_i32 : i32, i32, i32
  }
}

</mosaic_0001>

<llo_original>
// kernel: tpu_custom_call.1
$region0: #{tpu_custom_call.1}
  #allocation0 [shape = 'u32[]', space=smem, size = 0x4, offset = 0x4, fixed_abs, tag = 'smem constant byte address 0x4 - core index']
  #allocation1 [shape = 'u32[72,128]{1,0:T(1,128)}', space=vmem, size = 0x9000, scoped, tag = 'internal scratch']
  #allocation2 [shape = 'bf16[8,32]{1,0:T(8,128)(2,1)}', space=vmem, size = 0x800, scoped, tag = 'scratch operand']
  #allocation3 [shape = 'bf16[32,8]{1,0:T(8,128)(2,1)}', space=vmem, size = 0x2000, scoped, tag = 'scratch operand']
  #allocation4 [shape = 'bf16[8,32]{1,0:T(8,128)(2,1)}', space=vmem, size = 0x800, scoped, tag = 'scratch operand']
  #allocation5 [shape = 'f32[8,32]{1,0:T(8,128)}', space=vmem, size = 0x1000, scoped, tag = 'scratch operand']
  %s0 = inlined_call_operand.hbm [shape: f32[2,8,32], index: 0, kind: input, shape index: {}]
  %s1 = inlined_call_operand.hbm [shape: f32[2,8,32], index: 1, kind: input, shape index: {}]
  %s2 = inlined_call_operand.hbm [shape: f32[2,8,32], index: 2, kind: input, shape index: {}]
  %s3 = inlined_call_operand.hbm [shape: bf16[32,32], index: 3, kind: input, shape index: {}]
  %s4 = inlined_call_operand.vmem [shape: f32[1,32], index: 4, kind: input, shape index: {}]
  %s5 = inlined_call_operand.hbm [shape: bf16[32,32], index: 5, kind: input, shape index: {}]
  %s6 = inlined_call_operand.vmem [shape: f32[1,32], index: 6, kind: input, shape index: {}]
  %s7 = inlined_call_operand.hbm [shape: bf16[32,32], index: 7, kind: input, shape index: {}]
  %s8 = inlined_call_operand.vmem [shape: f32[1,32], index: 8, kind: input, shape index: {}]
  %s9 = inlined_call_operand.hbm [shape: bf16[32,32], index: 9, kind: input, shape index: {}]
  %s10 = inlined_call_operand.vmem [shape: f32[1,32], index: 10, kind: input, shape index: {}]
  %s11 = inlined_call_operand.hbm [shape: f32[2,8,32], index: 11, kind: output, shape index: {}]
  %s12 = sld [smem:[#allocation0]]
  $region109: #{tpu_custom_call.1} parent=0
    _
  %s14 = ssub.s32 1, %s12
  %s15 = scalar_select 0, %s14, %s12
  $region1: #{tpu_custom_call.1} parent=0
    #allocation6 [shape = 'u8[8192]{0}', space=vmem, size = 0x2000, scoped, tag = 'input window, operand 0']
    #allocation7 [shape = 's32[2]{0}', space=sflag, size = 0x8, scoped, tag = 'scoped memory for tpu_custom_call.1']
    #allocation8 [shape = 's32[2]{0}', space=sflag, size = 0x8, scoped, tag = 'scoped memory for tpu_custom_call.1']
    #allocation9 [shape = 'u8[8192]{0}', space=vmem, size = 0x2000, scoped, tag = 'input window, operand 1']
    #allocation10 [shape = 's32[2]{0}', space=sflag, size = 0x8, scoped, tag = 'scoped memory for tpu_custom_call.1']
    #allocation11 [shape = 'u8[8192]{0}', space=vmem, size = 0x2000, scoped, tag = 'input window, operand 2']
    #allocation12 [shape = 'u8[8192]{0}', space=vmem, size = 0x2000, scoped, tag = 'input window, operand 3, single buffered']
    #allocation13 [shape = 's32[1]{0}', space=sflag, size = 0x4, scoped, tag = 'scoped memory for tpu_custom_call.1']
    #allocation14 [shape = 'u8[8192]{0}', space=vmem, size = 0x2000, scoped, tag = 'input window, operand 5, single buffered']
    #allocation15 [shape = 'u8[8192]{0}', space=vmem, size = 0x2000, scoped, tag = 'input window, operand 7, single buffered']
    #allocation16 [shape = 's32[1]{0}', space=sflag, size = 0x4, scoped, tag = 'scoped memory for tpu_custom_call.1']
    #allocation17 [shape = 'u8[8192]{0}', space=vmem, size = 0x2000, scoped, tag = 'input window, operand 9, single buffered']
    #allocation18 [shape = 'u8[8192]{0}', space=vmem, size = 0x2000, scoped, tag = 'output window, operand 0']
    %16 = vsyncpa [#allocation7], 0
    %s17 = scalar_lea.sflag [#allocation7], 1
    %18 = vsyncpa %s17, 0
    %19 = vsyncpa [#allocation10], 0
    %s20 = scalar_lea.sflag [#allocation10], 1
    %21 = vsyncpa %s20, 0
    %22 = vsyncpa [#allocation13], 0
    %23 = vsyncpa [#allocation16], 0
    %24 = vsyncpa [#allocation8], 0
    %s25 = scalar_lea.sflag [#allocation8], 1
    %26 = vsyncpa %s25, 0
    loop: start=0, step=1, limit=4
    $region2: #{tpu_custom_call.1} parent=1 // loop_pre_header
      _
    $region3: #{tpu_custom_call.1} parent=1 // loop_header
      %s28 = sphi 0, %s32
      %p29 = scmp.ge.s32.totalorder %s28, 4
      %s35 = sphi 0, %s47
      %s36 = sphi 0, %s43
      %s37 = sphi 0, %s35
      %s38 = sphi 0, %s36
      %s39 = sphi 0, %s37
      %s40 = sphi 0, %s38
      %s52 = sphi 0, %s54
      %s55 = sphi 0, %s52
      %s56 = sphi 0, %s55
      %s72 = sphi 0, %s56
      %s78 = sphi 0, %s80
      %s81 = sphi 0, %s78
      %s82 = sphi 0, %s81
      %s98 = sphi 0, %s82
      %s104 = sphi 0, %s106
      %s107 = sphi 0, %s104
      %s108 = sphi 0, %s107
      %s124 = sphi 0, %s108
      %s128 = sphi 0, %s128
      %s130 = sphi 0, %s128
      %s131 = sphi 0, %s130
      %s145 = sphi 0, %s131
      %s149 = sphi 0, %s149
      %s151 = sphi 0, %s149
      %s152 = sphi 0, %s151
      %s166 = sphi 0, %s152
      %s170 = sphi 0, %s170
      %s172 = sphi 0, %s170
      %s173 = sphi 0, %s172
      %s187 = sphi 0, %s173
      %s191 = sphi 0, %s191
      %s193 = sphi 0, %s191
      %s194 = sphi 0, %s193
      %s208 = sphi 0, %s194
      %s212 = sphi 0, %s212
      %s214 = sphi 0, %s212
      %s215 = sphi 0, %s214
      %s229 = sphi 0, %s215
      %s233 = sphi 0, %s233
      %s235 = sphi 0, %s233
      %s236 = sphi 0, %s235
      %s250 = sphi 0, %s236
      %s254 = sphi 0, %s254
      %s256 = sphi 0, %s254
      %s257 = sphi 0, %s256
      %s271 = sphi 0, %s257
      %s275 = sphi 0, %s275
      %s277 = sphi 0, %s275
      %s278 = sphi 0, %s277
      %s292 = sphi 0, %s278
      %s300 = sphi 0, %s302
      %s303 = sphi 0, %s300
      %s304 = sphi 0, %s303
      %s320 = sphi 0, %s304
    $region4: #{tpu_custom_call.1} parent=1 // loop_header_branch
      %31 = sbr.rel (%p29) target = $region8
    $region5: #{tpu_custom_call.1} parent=1 // loop_body
      %s33 = ssub.s32 %s28, 1
      %s34 = ssub.s32 %s28, 2
      %s41 = sadd.s32 1, %s36
      %p42 = scmp.ge.s32.totalorder %s41, 1
      %s43 = scalar_select %p42, 0, %s41
      %s44 = sadd.s32 1, %s35
      %s45 = scalar_select %p42, %s44, %s35
      %p46 = scmp.ge.s32.totalorder %s45, 2
      %s47 = scalar_select %p46, 0, %s45
      %s48 = ssub.s32 %s35, %s47
      %s49 = ssub.s32 %s36, %s43
      %s50 = sor.u32 %s48, %s49
      %p51 = scmp.eq.s32.totalorder %s50, 0
      %s53 = sadd.s32 %s52, 1
      %s54 = scalar_select %p51, %s52, %s53
      %p57 = pneg %p51
      %p58 = scmp.eq.s32.totalorder %s28, 1
      %p59 = por %p57, %p58
      %p60 = scmp.ne.s32.totalorder %s52, %s55
      %p61 = scmp.eq.s32.totalorder %s28, 0
      %p62 = por %p60, %p61
      %p63 = scmp.ne.s32.totalorder %s52, %s55
      %p64 = scmp.eq.s32.totalorder %s33, 1
      %p65 = por %p63, %p64
      %p66 = scmp.ne.s32.totalorder %s55, %s56
      %p67 = scmp.eq.s32.totalorder %s33, 0
      %p68 = por %p66, %p67
      %p69 = scmp.ne.s32.totalorder %s55, %s56
      %p70 = scmp.eq.s32.totalorder %s34, 1
      %p71 = por %p69, %p70
      %p73 = scmp.ne.s32.totalorder %s56, %s72
      %p74 = scmp.eq.s32.totalorder %s34, 0
      %p75 = por %p73, %p74
      %s76 = ssub.s32 %s35, %s47
      %p77 = scmp.eq.s32.totalorder %s76, 0
      %s79 = sadd.s32 %s78, 1
      %s80 = scalar_select %p77, %s78, %s79
      %p83 = pneg %p77
      %p84 = scmp.eq.s32.totalorder %s28, 1
      %p85 = por %p83, %p84
      %p86 = scmp.ne.s32.totalorder %s78, %s81
      %p87 = scmp.eq.s32.totalorder %s28, 0
      %p88 = por %p86, %p87
      %p89 = scmp.ne.s32.totalorder %s78, %s81
      %p90 = scmp.eq.s32.totalorder %s33, 1
      %p91 = por %p89, %p90
      %p92 = scmp.ne.s32.totalorder %s81, %s82
      %p93 = scmp.eq.s32.totalorder %s33, 0
      %p94 = por %p92, %p93
      %p95 = scmp.ne.s32.totalorder %s81, %s82
      %p96 = scmp.eq.s32.totalorder %s34, 1
      %p97 = por %p95, %p96
      %p99 = scmp.ne.s32.totalorder %s82, %s98
      %p100 = scmp.eq.s32.totalorder %s34, 0
      %p101 = por %p99, %p100
      %s102 = ssub.s32 %s35, %s47
      %p103 = scmp.eq.s32.totalorder %s102, 0
      %s105 = sadd.s32 %s104, 1
      %s106 = scalar_select %p103, %s104, %s105
      %p109 = pneg %p103
      %p110 = scmp.eq.s32.totalorder %s28, 1
      %p111 = por %p109, %p110
      %p112 = scmp.ne.s32.totalorder %s104, %s107
      %p113 = scmp.eq.s32.totalorder %s28, 0
      %p114 = por %p112, %p113
      %p115 = scmp.ne.s32.totalorder %s104, %s107
      %p116 = scmp.eq.s32.totalorder %s33, 1
      %p117 = por %p115, %p116
      %p118 = scmp.ne.s32.totalorder %s107, %s108
      %p119 = scmp.eq.s32.totalorder %s33, 0
      %p120 = por %p118, %p119
      %p121 = scmp.ne.s32.totalorder %s107, %s108
      %p122 = scmp.eq.s32.totalorder %s34, 1
      %p123 = por %p121, %p122
      %p125 = scmp.ne.s32.totalorder %s108, %s124
      %p126 = scmp.eq.s32.totalorder %s34, 0
      %p127 = por %p125, %p126
      %s129 = sadd.s32 %s128, 1
      %p132 = scmp.eq.s32.totalorder %s28, 1
      %p133 = scmp.ne.s32.totalorder %s128, %s130
      %p134 = scmp.eq.s32.totalorder %s28, 0
      %p135 = por %p133, %p134
      %p136 = scmp.ne.s32.totalorder %s128, %s130
      %p137 = scmp.eq.s32.totalorder %s33, 1
      %p138 = por %p136, %p137
      %p139 = scmp.ne.s32.totalorder %s130, %s131
      %p140 = scmp.eq.s32.totalorder %s33, 0
      %p141 = por %p139, %p140
      %p142 = scmp.ne.s32.totalorder %s130, %s131
      %p143 = scmp.eq.s32.totalorder %s34, 1
      %p144 = por %p142, %p143
      %p146 = scmp.ne.s32.totalorder %s131, %s145
      %p147 = scmp.eq.s32.totalorder %s34, 0
      %p148 = por %p146, %p147
      %s150 = sadd.s32 %s149, 1
      %p153 = scmp.eq.s32.totalorder %s28, 1
      %p154 = scmp.ne.s32.totalorder %s149, %s151
      %p155 = scmp.eq.s32.totalorder %s28, 0
      %p156 = por %p154, %p155
      %p157 = scmp.ne.s32.totalorder %s149, %s151
      %p158 = scmp.eq.s32.totalorder %s33, 1
      %p159 = por %p157, %p158
      %p160 = scmp.ne.s32.totalorder %s151, %s152
      %p161 = scmp.eq.s32.totalorder %s33, 0
      %p162 = por %p160, %p161
      %p163 = scmp.ne.s32.totalorder %s151, %s152
      %p164 = scmp.eq.s32.totalorder %s34, 1
      %p165 = por %p163, %p164
      %p167 = scmp.ne.s32.totalorder %s152, %s166
      %p168 = scmp.eq.s32.totalorder %s34, 0
      %p169 = por %p167, %p168
      %s171 = sadd.s32 %s170, 1
      %p174 = scmp.eq.s32.totalorder %s28, 1
      %p175 = scmp.ne.s32.totalorder %s170, %s172
      %p176 = scmp.eq.s32.totalorder %s28, 0
      %p177 = por %p175, %p176
      %p178 = scmp.ne.s32.totalorder %s170, %s172
      %p179 = scmp.eq.s32.totalorder %s33, 1
      %p180 = por %p178, %p179
      %p181 = scmp.ne.s32.totalorder %s172, %s173
      %p182 = scmp.eq.s32.totalorder %s33, 0
      %p183 = por %p181, %p182
      %p184 = scmp.ne.s32.totalorder %s172, %s173
      %p185 = scmp.eq.s32.totalorder %s34, 1
      %p186 = por %p184, %p185
      %p188 = scmp.ne.s32.totalorder %s173, %s187
      %p189 = scmp.eq.s32.totalorder %s34, 0
      %p190 = por %p188, %p189
      %s192 = sadd.s32 %s191, 1
      %p195 = scmp.eq.s32.totalorder %s28, 1
      %p196 = scmp.ne.s32.totalorder %s191, %s193
      %p197 = scmp.eq.s32.totalorder %s28, 0
      %p198 = por %p196, %p197
      %p199 = scmp.ne.s32.totalorder %s191, %s193
      %p200 = scmp.eq.s32.totalorder %s33, 1
      %p201 = por %p199, %p200
      %p202 = scmp.ne.s32.totalorder %s193, %s194
      %p203 = scmp.eq.s32.totalorder %s33, 0
      %p204 = por %p202, %p203
      %p205 = scmp.ne.s32.totalorder %s193, %s194
      %p206 = scmp.eq.s32.totalorder %s34, 1
      %p207 = por %p205, %p206
      %p209 = scmp.ne.s32.totalorder %s194, %s208
      %p210 = scmp.eq.s32.totalorder %s34, 0
      %p211 = por %p209, %p210
      %s213 = sadd.s32 %s212, 1
      %p216 = scmp.eq.s32.totalorder %s28, 1
      %p217 = scmp.ne.s32.totalorder %s212, %s214
      %p218 = scmp.eq.s32.totalorder %s28, 0
      %p219 = por %p217, %p218
      %p220 = scmp.ne.s32.totalorder %s212, %s214
      %p221 = scmp.eq.s32.totalorder %s33, 1
      %p222 = por %p220, %p221
      %p223 = scmp.ne.s32.totalorder %s214, %s215
      %p224 = scmp.eq.s32.totalorder %s33, 0
      %p225 = por %p223, %p224
      %p226 = scmp.ne.s32.totalorder %s214, %s215
      %p227 = scmp.eq.s32.totalorder %s34, 1
      %p228 = por %p226, %p227
      %p230 = scmp.ne.s32.totalorder %s215, %s229
      %p231 = scmp.eq.s32.totalorder %s34, 0
      %p232 = por %p230, %p231
      %s234 = sadd.s32 %s233, 1
      %p237 = scmp.eq.s32.totalorder %s28, 1
      %p238 = scmp.ne.s32.totalorder %s233, %s235
      %p239 = scmp.eq.s32.totalorder %s28, 0
      %p240 = por %p238, %p239
      %p241 = scmp.ne.s32.totalorder %s233, %s235
      %p242 = scmp.eq.s32.totalorder %s33, 1
      %p243 = por %p241, %p242
      %p244 = scmp.ne.s32.totalorder %s235, %s236
      %p245 = scmp.eq.s32.totalorder %s33, 0
      %p246 = por %p244, %p245
      %p247 = scmp.ne.s32.totalorder %s235, %s236
      %p248 = scmp.eq.s32.totalorder %s34, 1
      %p249 = por %p247, %p248
      %p251 = scmp.ne.s32.totalorder %s236, %s250
      %p252 = scmp.eq.s32.totalorder %s34, 0
      %p253 = por %p251, %p252
      %s255 = sadd.s32 %s254, 1
      %p258 = scmp.eq.s32.totalorder %s28, 1
      %p259 = scmp.ne.s32.totalorder %s254, %s256
      %p260 = scmp.eq.s32.totalorder %s28, 0
      %p261 = por %p259, %p260
      %p262 = scmp.ne.s32.totalorder %s254, %s256
      %p263 = scmp.eq.s32.totalorder %s33, 1
      %p264 = por %p262, %p263
      %p265 = scmp.ne.s32.totalorder %s256, %s257
      %p266 = scmp.eq.s32.totalorder %s33, 0
      %p267 = por %p265, %p266
      %p268 = scmp.ne.s32.totalorder %s256, %s257
      %p269 = scmp.eq.s32.totalorder %s34, 1
      %p270 = por %p268, %p269
      %p272 = scmp.ne.s32.totalorder %s257, %s271
      %p273 = scmp.eq.s32.totalorder %s34, 0
      %p274 = por %p272, %p273
      %s276 = sadd.s32 %s275, 1
      %p279 = scmp.eq.s32.totalorder %s28, 1
      %p280 = scmp.ne.s32.totalorder %s275, %s277
      %p281 = scmp.eq.s32.totalorder %s28, 0
      %p282 = por %p280, %p281
      %p283 = scmp.ne.s32.totalorder %s275, %s277
      %p284 = scmp.eq.s32.totalorder %s33, 1
      %p285 = por %p283, %p284
      %p286 = scmp.ne.s32.totalorder %s277, %s278
      %p287 = scmp.eq.s32.totalorder %s33, 0
      %p288 = por %p286, %p287
      %p289 = scmp.ne.s32.totalorder %s277, %s278
      %p290 = scmp.eq.s32.totalorder %s34, 1
      %p291 = por %p289, %p290
      %p293 = scmp.ne.s32.totalorder %s278, %s292
      %p294 = scmp.eq.s32.totalorder %s34, 0
      %p295 = por %p293, %p294
      %s296 = ssub.s32 %s35, %s47
      %s297 = ssub.s32 %s36, %s43
      %s298 = sor.u32 %s296, %s297
      %p299 = scmp.eq.s32.totalorder %s298, 0
      %s301 = sadd.s32 %s300, 1
      %s302 = scalar_select %p299, %s300, %s301
      %p305 = pneg %p299
      %p306 = scmp.eq.s32.totalorder %s28, 1
      %p307 = por %p305, %p306
      %p308 = scmp.ne.s32.totalorder %s300, %s303
      %p309 = scmp.eq.s32.totalorder %s28, 0
      %p310 = por %p308, %p309
      %p311 = scmp.ne.s32.totalorder %s300, %s303
      %p312 = scmp.eq.s32.totalorder %s33, 1
      %p313 = por %p311, %p312
      %p314 = scmp.ne.s32.totalorder %s303, %s304
      %p315 = scmp.eq.s32.totalorder %s33, 0
      %p316 = por %p314, %p315
      %p317 = scmp.ne.s32.totalorder %s303, %s304
      %p318 = scmp.eq.s32.totalorder %s34, 1
      %p319 = por %p317, %p318
      %p321 = scmp.ne.s32.totalorder %s304, %s320
      %p322 = scmp.eq.s32.totalorder %s34, 0
      %p323 = por %p321, %p322
      %p324 = scmp.le.s32.totalorder 1, %s28
      %p325 = scmp.lt.s32.totalorder %s28, 3
      %p326 = pnand %p324, %p325
      %p327 = pneg %p326
      // Predicated region
      $region9: #{tpu_custom_call.1} parent=5 // pred_check
        _
      $region10: #{tpu_custom_call.1} parent=5 // pred_check_branch
        %329 = sbr.rel (%p326) target = $region12
      $region11: #{tpu_custom_call.1} parent=5 // pred_region
        %s330 = ssub.s32 %s28, 1
        // Predicated region
        $region13: #{tpu_custom_call.1} parent=11 // pred_check
          %p331 = pneg %p141
        $region14: #{tpu_custom_call.1} parent=11 // pred_check_branch
          %333 = sbr.rel (%p331) target = $region16
        $region15: #{tpu_custom_call.1} parent=11 // pred_region
          %335 = vsyncadd [#allocation13], 0
          %s336 = sshll.u32 %s3, 4
          %s337 = int_to_ptr.hbm [resolvable:$true] %s336
          %s338 = sshll.u32 [#allocation12], 4
          %s339 = int_to_ptr.vmem [resolvable:$true] %s338
          %344 = dma.hbm_to_vmem [thread:$0]  %s337, 256, %s339, [#allocation13], 64, 64, 4
        $region16: #{tpu_custom_call.1} parent=11 // pred_fallthru
          _
        // Predicated region
        $region17: #{tpu_custom_call.1} parent=11 // pred_check
          %p345 = pneg %p162
        $region18: #{tpu_custom_call.1} parent=11 // pred_check_branch
          %347 = sbr.rel (%p345) target = $region20
        $region19: #{tpu_custom_call.1} parent=11 // pred_region
          _
        $region20: #{tpu_custom_call.1} parent=11 // pred_fallthru
          _
        // Predicated region
        $region21: #{tpu_custom_call.1} parent=11 // pred_check
          %p348 = pneg %p183
        $region22: #{tpu_custom_call.1} parent=11 // pred_check_branch
          %350 = sbr.rel (%p348) target = $region24
        $region23: #{tpu_custom_call.1} parent=11 // pred_region
          %352 = vsyncadd [#allocation13], 0
          %s353 = sshll.u32 %s5, 4
          %s354 = int_to_ptr.hbm [resolvable:$true] %s353
          %s355 = sshll.u32 [#allocation14], 4
          %s356 = int_to_ptr.vmem [resolvable:$true] %s355
          %361 = dma.hbm_to_vmem [thread:$0]  %s354, 256, %s356, [#allocation13], 64, 64, 4
        $region24: #{tpu_custom_call.1} parent=11 // pred_fallthru
          _
        // Predicated region
        $region25: #{tpu_custom_call.1} parent=11 // pred_check
          %p362 = pneg %p204
        $region26: #{tpu_custom_call.1} parent=11 // pred_check_branch
          %364 = sbr.rel (%p362) target = $region28
        $region27: #{tpu_custom_call.1} parent=11 // pred_region
          _
        $region28: #{tpu_custom_call.1} parent=11 // pred_fallthru
          _
        // Predicated region
        $region29: #{tpu_custom_call.1} parent=11 // pred_check
          %p365 = pneg %p225
        $region30: #{tpu_custom_call.1} parent=11 // pred_check_branch
          %367 = sbr.rel (%p365) target = $region32
        $region31: #{tpu_custom_call.1} parent=11 // pred_region
          %369 = vsyncadd [#allocation16], 0
          %s370 = sshll.u32 %s7, 4
          %s371 = int_to_ptr.hbm [resolvable:$true] %s370
          %s372 = sshll.u32 [#allocation15], 4
          %s373 = int_to_ptr.vmem [resolvable:$true] %s372
          %378 = dma.hbm_to_vmem [thread:$0]  %s371, 256, %s373, [#allocation16], 64, 64, 4
        $region32: #{tpu_custom_call.1} parent=11 // pred_fallthru
          _
        // Predicated region
        $region33: #{tpu_custom_call.1} parent=11 // pred_check
          %p379 = pneg %p246
        $region34: #{tpu_custom_call.1} parent=11 // pred_check_branch
          %381 = sbr.rel (%p379) target = $region36
        $region35: #{tpu_custom_call.1} parent=11 // pred_region
          _
        $region36: #{tpu_custom_call.1} parent=11 // pred_fallthru
          _
        // Predicated region
        $region37: #{tpu_custom_call.1} parent=11 // pred_check
          %p382 = pneg %p267
        $region38: #{tpu_custom_call.1} parent=11 // pred_check_branch
          %384 = sbr.rel (%p382) target = $region40
        $region39: #{tpu_custom_call.1} parent=11 // pred_region
          %386 = vsyncadd [#allocation16], 0
          %s387 = sshll.u32 %s9, 4
          %s388 = int_to_ptr.hbm [resolvable:$true] %s387
          %s389 = sshll.u32 [#allocation17], 4
          %s390 = int_to_ptr.vmem [resolvable:$true] %s389
          %395 = dma.hbm_to_vmem [thread:$0]  %s388, 256, %s390, [#allocation16], 64, 64, 4
        $region40: #{tpu_custom_call.1} parent=11 // pred_fallthru
          _
        // Predicated region
        $region41: #{tpu_custom_call.1} parent=11 // pred_check
          %p396 = pneg %p288
        $region42: #{tpu_custom_call.1} parent=11 // pred_check_branch
          %398 = sbr.rel (%p396) target = $region44
        $region43: #{tpu_custom_call.1} parent=11 // pred_region
          _
        $region44: #{tpu_custom_call.1} parent=11 // pred_fallthru
          _
      $region12: #{tpu_custom_call.1} parent=5 // pred_fallthru
        _
      %p399 = scmp.lt.s32.totalorder %s28, 2
      // Predicated region
      $region45: #{tpu_custom_call.1} parent=5 // pred_check
        %p400 = pneg %p399
      $region46: #{tpu_custom_call.1} parent=5 // pred_check_branch
        %402 = sbr.rel (%p400) target = $region48
      $region47: #{tpu_custom_call.1} parent=5 // pred_region
        // Predicated region
        $region49: #{tpu_custom_call.1} parent=47 // pred_check
          %p403 = pneg %p62
        $region50: #{tpu_custom_call.1} parent=47 // pred_check_branch
          %405 = sbr.rel (%p403) target = $region52
        $region51: #{tpu_custom_call.1} parent=47 // pred_region
          %s406 = sand.u32 %s52, 1
          %s407 = scalar_lea.sflag [#allocation7], %s406
          %s408 = sand.u32 %s52, 1
          %s409 = smul.addr %s408, 8
          %s410 = scalar_lea.vmem [#allocation6], %s409
          %412 = vsyncadd %s407, 0
          %s413 = sadd.s32 %s36, %s35
          %s414 = smul.addr %s413, 8
          %s415 = scalar_lea.hbm %s0, %s414
          %s417 = sshll.u32 %s415, 4
          %s418 = int_to_ptr.hbm [resolvable:$true] %s417
          %s419 = sshll.u32 %s410, 4
          %s420 = int_to_ptr.vmem [resolvable:$true] %s419
          %422 = dma.hbm_to_vmem [thread:$0]  %s418, 128, %s420, %s407
        $region52: #{tpu_custom_call.1} parent=47 // pred_fallthru
          _
        // Predicated region
        $region53: #{tpu_custom_call.1} parent=47 // pred_check
          %p423 = pneg %p88
        $region54: #{tpu_custom_call.1} parent=47 // pred_check_branch
          %425 = sbr.rel (%p423) target = $region56
        $region55: #{tpu_custom_call.1} parent=47 // pred_region
          %s426 = sand.u32 %s28, 1
          %s427 = scalar_lea.sflag [#allocation10], %s426
          %s428 = sand.u32 %s78, 1
          %s429 = smul.addr %s428, 8
          %s430 = scalar_lea.vmem [#allocation9], %s429
          %432 = vsyncadd %s427, 0
          %s433 = smul.addr %s35, 8
          %s434 = scalar_lea.hbm %s1, %s433
          %s436 = sshll.u32 %s434, 4
          %s437 = int_to_ptr.hbm [resolvable:$true] %s436
          %s438 = sshll.u32 %s430, 4
          %s439 = int_to_ptr.vmem [resolvable:$true] %s438
          %441 = dma.hbm_to_vmem [thread:$0]  %s437, 128, %s439, %s427
        $region56: #{tpu_custom_call.1} parent=47 // pred_fallthru
          _
        // Predicated region
        $region57: #{tpu_custom_call.1} parent=47 // pred_check
          %p442 = pneg %p114
        $region58: #{tpu_custom_call.1} parent=47 // pred_check_branch
          %444 = sbr.rel (%p442) target = $region60
        $region59: #{tpu_custom_call.1} parent=47 // pred_region
          %s445 = sand.u32 %s28, 1
          %s446 = scalar_lea.sflag [#allocation10], %s445
          %s447 = sand.u32 %s104, 1
          %s448 = smul.addr %s447, 8
          %s449 = scalar_lea.vmem [#allocation11], %s448
          %451 = vsyncadd %s446, 0
          %s452 = smul.addr %s35, 8
          %s453 = scalar_lea.hbm %s2, %s452
          %s455 = sshll.u32 %s453, 4
          %s456 = int_to_ptr.hbm [resolvable:$true] %s455
          %s457 = sshll.u32 %s449, 4
          %s458 = int_to_ptr.vmem [resolvable:$true] %s457
          %460 = dma.hbm_to_vmem [thread:$0]  %s456, 128, %s458, %s446
        $region60: #{tpu_custom_call.1} parent=47 // pred_fallthru
          _
      $region48: #{tpu_custom_call.1} parent=5 // pred_fallthru
        _
      %p461 = scmp.le.s32.totalorder 1, %s28
      %p462 = scmp.lt.s32.totalorder %s28, 3
      %p463 = pnand %p461, %p462
      %p464 = pneg %p463
      // Predicated region
      $region61: #{tpu_custom_call.1} parent=5 // pred_check
        _
      $region62: #{tpu_custom_call.1} parent=5 // pred_check_branch
        %466 = sbr.rel (%p463) target = $region64
      $region63: #{tpu_custom_call.1} parent=5 // pred_region
        %s467 = ssub.s32 %s28, 1
        %s468 = sand.u32 %s55, 1
        %s469 = scalar_lea.sflag [#allocation7], %s468
        %s470 = sand.u32 %s55, 1
        %s471 = smul.addr %s470, 8
        %s472 = scalar_lea.vmem [#allocation6], %s471
        // Predicated region
        $region65: #{tpu_custom_call.1} parent=63 // pred_check
          %p473 = pneg %p68
        $region66: #{tpu_custom_call.1} parent=63 // pred_check_branch
          %475 = sbr.rel (%p473) target = $region68
        $region67: #{tpu_custom_call.1} parent=63 // pred_region
          %477 = dma.done %s469, 128
        $region68: #{tpu_custom_call.1} parent=63 // pred_fallthru
          _
        %s478 = sand.u32 %s33, 1
        %s479 = scalar_lea.sflag [#allocation10], %s478
        %s480 = sand.u32 %s81, 1
        %s481 = smul.addr %s480, 8
        %s482 = scalar_lea.vmem [#allocation9], %s481
        // Predicated region
        $region69: #{tpu_custom_call.1} parent=63 // pred_check
          %p483 = pneg %p94
        $region70: #{tpu_custom_call.1} parent=63 // pred_check_branch
          %485 = sbr.rel (%p483) target = $region72
        $region71: #{tpu_custom_call.1} parent=63 // pred_region
          %487 = dma.done %s479, 128
        $region72: #{tpu_custom_call.1} parent=63 // pred_fallthru
          _
        %s488 = sand.u32 %s33, 1
        %s489 = scalar_lea.sflag [#allocation10], %s488
        %s490 = sand.u32 %s107, 1
        %s491 = smul.addr %s490, 8
        %s492 = scalar_lea.vmem [#allocation11], %s491
        // Predicated region
        $region73: #{tpu_custom_call.1} parent=63 // pred_check
          %p493 = pneg %p120
        $region74: #{tpu_custom_call.1} parent=63 // pred_check_branch
          %495 = sbr.rel (%p493) target = $region76
        $region75: #{tpu_custom_call.1} parent=63 // pred_region
          %497 = dma.done %s489, 128
        $region76: #{tpu_custom_call.1} parent=63 // pred_fallthru
          _
        // Predicated region
        $region77: #{tpu_custom_call.1} parent=63 // pred_check
          %p498 = pneg %p141
        $region78: #{tpu_custom_call.1} parent=63 // pred_check_branch
          %500 = sbr.rel (%p498) target = $region80
        $region79: #{tpu_custom_call.1} parent=63 // pred_region
          %502 = dma.done [#allocation13], 256
        $region80: #{tpu_custom_call.1} parent=63 // pred_fallthru
          _
        // Predicated region
        $region81: #{tpu_custom_call.1} parent=63 // pred_check
          %p503 = pneg %p183
        $region82: #{tpu_custom_call.1} parent=63 // pred_check_branch
          %505 = sbr.rel (%p503) target = $region84
        $region83: #{tpu_custom_call.1} parent=63 // pred_region
          %507 = dma.done [#allocation13], 256
        $region84: #{tpu_custom_call.1} parent=63 // pred_fallthru
          _
        // Predicated region
        $region85: #{tpu_custom_call.1} parent=63 // pred_check
          %p508 = pneg %p225
        $region86: #{tpu_custom_call.1} parent=63 // pred_check_branch
          %510 = sbr.rel (%p508) target = $region88
        $region87: #{tpu_custom_call.1} parent=63 // pred_region
          %512 = dma.done [#allocation16], 256
        $region88: #{tpu_custom_call.1} parent=63 // pred_fallthru
          _
        // Predicated region
        $region89: #{tpu_custom_call.1} parent=63 // pred_check
          %p513 = pneg %p267
        $region90: #{tpu_custom_call.1} parent=63 // pred_check_branch
          %515 = sbr.rel (%p513) target = $region92
        $region91: #{tpu_custom_call.1} parent=63 // pred_region
          %517 = dma.done [#allocation16], 256
        $region92: #{tpu_custom_call.1} parent=63 // pred_fallthru
          _
        %s518 = sand.u32 %s55, 1
        %s519 = scalar_lea.sflag [#allocation7], %s518
        %s520 = sand.u32 %s55, 1
        %s521 = smul.addr %s520, 8
        %s522 = scalar_lea.vmem [#allocation6], %s521
        %p523 = pneg %p68
        %p524 = pneg %p65
        %s525 = sand.u32 %s33, 1
        %s526 = scalar_lea.sflag [#allocation10], %s525
        %s527 = sand.u32 %s81, 1
        %s528 = smul.addr %s527, 8
        %s529 = scalar_lea.vmem [#allocation9], %s528
        %p530 = pneg %p94
        %p531 = pneg %p91
        %s532 = sand.u32 %s33, 1
        %s533 = scalar_lea.sflag [#allocation10], %s532
        %s534 = sand.u32 %s107, 1
        %s535 = smul.addr %s534, 8
        %s536 = scalar_lea.vmem [#allocation11], %s535
        %p537 = pneg %p120
        %p538 = pneg %p117
        %p539 = pneg %p141
        %p540 = pneg %p138
        %p541 = pneg %p162
        %p542 = pneg %p159
        %p543 = pneg %p183
        %p544 = pneg %p180
        %p545 = pneg %p204
        %p546 = pneg %p201
        %p547 = pneg %p225
        %p548 = pneg %p222
        %p549 = pneg %p246
        %p550 = pneg %p243
        %p551 = pneg %p267
        %p552 = pneg %p264
        %p553 = pneg %p288
        %p554 = pneg %p285
        %p555 = pneg %p316
        %p556 = pneg %p313
        %s557 = sand.u32 %s303, 1
        %s558 = scalar_lea.sflag [#allocation8], %s557
        %s559 = sand.u32 %s303, 1
        %s560 = smul.addr %s559, 8
        %s561 = scalar_lea.vmem [#allocation18], %s560
        %p563 = scmp.eq.s32.totalorder %s38, 0
        // Predicated region
        $region93: #{tpu_custom_call.1} parent=63 // pred_check
          %p564 = pneg %p563
        $region94: #{tpu_custom_call.1} parent=63 // pred_check_branch
          %566 = sbr.rel (%p564) target = $region96
        $region95: #{tpu_custom_call.1} parent=63 // pred_region
          %v567 = vld [vmem:[%s482] sm:$0xff]
          %v568 = vpack.c.bf16 %v567, %v567
          %v569 = vld [vmem:[%s492] sm:$0xff]
          %v570 = vpack.c.bf16 %v569, %v569
          %v571 = vld [vmem:[#allocation14] sm:$0xf]
          %v572 = vld [vmem:[#allocation14 + $0x4] sm:$0xf]
          %v573 = vld [vmem:[#allocation14 + $0x8] sm:$0xf]
          %v574 = vld [vmem:[#allocation14 + $0xc] sm:$0xf]
          %v575 = vld [vmem:[%s6] sm:$0x1]
          %v577 = vperm.slane %v575, 0
          %v583 = vunpack.c.l.b16 %v571
          %v584 = vunpack.c.l.b16 %v572
          %v585 = vunpack.c.l.b16 %v573
          %v586 = vunpack.c.l.b16 %v574
          %v587 = vpack.c.b16 %v584, %v583
          %v588 = vpack.c.b16 %v586, %v585
          %vm591 = vcmask 261120
          %v593 = vsel %vm591, %v568, 0
          %595 = vmatpush.bf16.msra.mxu0 0
          %596 = vmatpush.bf16.msra.mxu0 0
          %597 = vmatpush.bf16.msra.mxu0 0
          %598 = vmatpush.bf16.msra.mxu0 0
          %599 = vmatpush.bf16.msra.mxu0 0
          %600 = vmatpush.bf16.msra.mxu0 0
          %601 = vmatpush.bf16.msra.mxu0 %v588
          %602 = vmatpush.bf16.msra.mxu0 %v587
          %603 = vmatmul.bf16.gmra.mxu0 %v593
          %v604 = vpop.f32.mrf.mxu0
          %v605 = vadd.f32 %v577, %v604
          %v606 = vpop.f32.mrf.mxu0
          %607 = vdwg.mxu0
          %v608 = vld [vmem:[#allocation15] sm:$0xf]
          %v609 = vld [vmem:[#allocation15 + $0x4] sm:$0xf]
          %v610 = vld [vmem:[#allocation15 + $0x8] sm:$0xf]
          %v611 = vld [vmem:[#allocation15 + $0xc] sm:$0xf]
          %v612 = vld [vmem:[%s8] sm:$0x1]
          %v614 = vperm.slane %v612, 0
          %v620 = vunpack.c.l.b16 %v608
          %v621 = vunpack.c.l.b16 %v609
          %v622 = vunpack.c.l.b16 %v610
          %v623 = vunpack.c.l.b16 %v611
          %v624 = vpack.c.b16 %v621, %v620
          %v625 = vpack.c.b16 %v623, %v622
          %v629 = vsel %vm591, %v570, 0
          %631 = vmatpush.bf16.msra.mxu0 0
          %632 = vmatpush.bf16.msra.mxu0 0
          %633 = vmatpush.bf16.msra.mxu0 0
          %634 = vmatpush.bf16.msra.mxu0 0
          %635 = vmatpush.bf16.msra.mxu0 0
          %636 = vmatpush.bf16.msra.mxu0 0
          %637 = vmatpush.bf16.msra.mxu0 %v625
          %638 = vmatpush.bf16.msra.mxu0 %v624
          %639 = vmatmul.bf16.gmra.mxu0 %v629
          %v640 = vpop.f32.mrf.mxu0
          %v641 = vadd.f32 %v614, %v640
          %v642 = vpop.f32.mrf.mxu0
          %643 = vdwg.mxu0
          %644 = vxpose.xlu0.b32.start [1/16] %v605, 128
          %645 = vxpose.xlu0.b32.cont [2/16] 0.0, 128
          %646 = vxpose.xlu0.b32.cont [3/16] 0.0, 128
          %647 = vxpose.xlu0.b32.cont [4/16] 0.0, 128
          %648 = vxpose.xlu0.b32.cont [5/16] 0.0, 128
          %649 = vxpose.xlu0.b32.cont [6/16] 0.0, 128
          %650 = vxpose.xlu0.b32.cont [7/16] 0.0, 128
          %651 = vxpose.xlu0.b32.cont [8/16] 0.0, 128
          %652 = vxpose.xlu0.b32.cont [9/16] 0.0, 128
          %653 = vxpose.xlu0.b32.cont [10/16] 0.0, 128
          %654 = vxpose.xlu0.b32.cont [11/16] 0.0, 128
          %655 = vxpose.xlu0.b32.cont [12/16] 0.0, 128
          %656 = vxpose.xlu0.b32.cont [13/16] 0.0, 128
          %657 = vxpose.xlu0.b32.cont [14/16] 0.0, 128
          %658 = vxpose.xlu0.b32.cont [15/16] 0.0, 128
          %659 = vxpose.xlu0.b32.end [16/16] 0.0, 128
          %v660 = vpop.trf.xlu0
          %v661 = vpop.trf.xlu0
          %v662 = vpop.trf.xlu0
          %v663 = vpop.trf.xlu0
          %v664 = vpop.trf.xlu0
          %v665 = vpop.trf.xlu0
          %v666 = vpop.trf.xlu0
          %v667 = vpop.trf.xlu0
          %v668 = vpop.trf.xlu0
          %v669 = vpop.trf.xlu0
          %v670 = vpop.trf.xlu0
          %v671 = vpop.trf.xlu0
          %v672 = vpop.trf.xlu0
          %v673 = vpop.trf.xlu0
          %v674 = vpop.trf.xlu0
          %v675 = vpop.trf.xlu0
          %v676 = vpack.c.bf16 %v660, %v660
          %v677 = vpack.c.bf16 %v661, %v661
          %v678 = vpack.c.bf16 %v662, %v662
          %v679 = vpack.c.bf16 %v663, %v663
          %vm680 = vcmask 60416
          %681 = vst.msk [vmem:[#allocation3] sm:$0xf] %vm680, %v676
          %682 = vst.msk [vmem:[#allocation3 + $0x4] sm:$0xf] %vm680, %v677
          %683 = vst.msk [vmem:[#allocation3 + $0x8] sm:$0xf] %vm680, %v678
          %684 = vst.msk [vmem:[#allocation3 + $0xc] sm:$0xf] %vm680, %v679
          %v685 = vpack.c.bf16 %v641, %v641
          %vm686 = vcmask 257024
          %687 = vst.msk [vmem:[#allocation4] sm:$0xf] %vm686, %v685
        $region96: #{tpu_custom_call.1} parent=63 // pred_fallthru
          _
        %v688 = vld [vmem:[%s472] sm:$0xff]
        %v689 = vpack.c.bf16 %v688, %v688
        %v690 = vld [vmem:[#allocation12] sm:$0xf]
        %v691 = vld [vmem:[#allocation12 + $0x4] sm:$0xf]
        %v692 = vld [vmem:[#allocation12 + $0x8] sm:$0xf]
        %v693 = vld [vmem:[#allocation12 + $0xc] sm:$0xf]
        %v694 = vld [vmem:[%s4] sm:$0x1]
        %v696 = vperm.slane %v694, 0
        %v702 = vunpack.c.l.b16 %v690
        %v703 = vunpack.c.l.b16 %v691
        %v704 = vunpack.c.l.b16 %v692
        %v705 = vunpack.c.l.b16 %v693
        %v706 = vpack.c.b16 %v703, %v702
        %v707 = vpack.c.b16 %v705, %v704
        %vm710 = vcmask 261120
        %v712 = vsel %vm710, %v689, 0
        %714 = vmatpush.bf16.msra.mxu0 0
        %715 = vmatpush.bf16.msra.mxu0 0
        %716 = vmatpush.bf16.msra.mxu0 0
        %717 = vmatpush.bf16.msra.mxu0 0
        %718 = vmatpush.bf16.msra.mxu0 0
        %719 = vmatpush.bf16.msra.mxu0 0
        %720 = vmatpush.bf16.msra.mxu0 %v707
        %721 = vmatpush.bf16.msra.mxu0 %v706
        %722 = vmatmul.bf16.gmra.mxu0 %v712
        %v723 = vpop.f32.mrf.mxu0
        %v724 = vadd.f32 %v696, %v723
        %v725 = vpop.f32.mrf.mxu0
        %726 = vdwg.mxu0
        %v727 = vmul.f32 %v724, 0.35355338
        %v728 = vpack.c.bf16 %v727, %v727
        %vm729 = vcmask 257024
        %730 = vst.msk [vmem:[#allocation2] sm:$0xf] %vm729, %v728
        %v731 = vld [vmem:[#allocation2] sm:$0xf]
        %v732 = vld [vmem:[#allocation3] sm:$0xf]
        %vm733 = vcmask 64512
        %v735 = vsel %vm733, %v731, 0
        %vm737 = vcmask 1043456
        %v739 = vsel %vm737, %v732, 0
        %741 = vmatpush.bf16.msra.mxu0 0
        %742 = vmatpush.bf16.msra.mxu0 0
        %743 = vmatpush.bf16.msra.mxu0 0
        %744 = vmatpush.bf16.msra.mxu0 0
        %745 = vmatpush.bf16.msra.mxu0 0
        %746 = vmatpush.bf16.msra.mxu0 0
        %747 = vmatpush.bf16.msra.mxu0 0
        %748 = vmatpush.bf16.msra.mxu0 %v739
        %749 = vmatmul.bf16.gmra.mxu0 %v735
        %v750 = vpop.f32.mrf.mxu0
        %v751 = vadd.f32 0.0, %v750
        %v752 = vpop.f32.mrf.mxu0
        %753 = vdwg.mxu0
        %v754 = vsel %vm733, %v751, -inf
        %755 = vmax.xlane.f32.xlu0 %v754
        %v756 = vpop.xlane.xlu0 %755
        %v757 = vsub.f32 %v751, %v756
        %v758 = vmul.f32 %v757, 1.442695
        %v759 = vpow.pop %v758
        %v760 = vsel %vm733, %v759, 0.0
        %761 = vadd.xlane.f32.xlu0 %v760
        %v762 = vpop.xlane.xlu0 %761
        %v763 = vrcp.pop %v762
        %v764 = vmul.f32 %v759, %v763
        %v765 = vpack.c.bf16 %v764, %v764
        %v766 = vld [vmem:[#allocation4] sm:$0xf]
        %v768 = vsel %vm733, %v765, 0
        %v771 = vsel %vm737, %v766, 0
        %773 = vmatpush.bf16.msra.mxu0 0
        %774 = vmatpush.bf16.msra.mxu0 0
        %775 = vmatpush.bf16.msra.mxu0 0
        %776 = vmatpush.bf16.msra.mxu0 0
        %777 = vmatpush.bf16.msra.mxu0 0
        %778 = vmatpush.bf16.msra.mxu0 0
        %779 = vmatpush.bf16.msra.mxu0 0
        %780 = vmatpush.bf16.msra.mxu0 %v771
        %781 = vmatmul.bf16.gmra.mxu0 %v768
        %v782 = vpop.f32.mrf.mxu0
        %v783 = vadd.f32 0.0, %v782
        %v784 = vpop.f32.mrf.mxu0
        %785 = vdwg.mxu0
        %786 = vst.msk [vmem:[#allocation5] sm:$0xff] %vm733, %v783
        %v787 = vld [vmem:[#allocation2] sm:$0xf]
        %v788 = vld [vmem:[#allocation3 + $0x4] sm:$0xf]
        %v790 = vunpack.c.l.b16 %v787
        %v791 = vpack.c.b16 %v790, %v790
        %792 = vrot.lane.b32.xlu0 %v791, 120
        %v793 = vpop.permute.xlu0 %792
        %v795 = vsel %vm733, %v793, 0
        %v798 = vsel %vm737, %v788, 0
        %800 = vmatpush.bf16.msra.mxu0 0
        %801 = vmatpush.bf16.msra.mxu0 0
        %802 = vmatpush.bf16.msra.mxu0 0
        %803 = vmatpush.bf16.msra.mxu0 0
        %804 = vmatpush.bf16.msra.mxu0 0
        %805 = vmatpush.bf16.msra.mxu0 0
        %806 = vmatpush.bf16.msra.mxu0 0
        %807 = vmatpush.bf16.msra.mxu0 %v798
        %808 = vmatmul.bf16.gmra.mxu0 %v795
        %v809 = vpop.f32.mrf.mxu0
        %v810 = vadd.f32 0.0, %v809
        %v811 = vpop.f32.mrf.mxu0
        %812 = vdwg.mxu0
        %v813 = vsel %vm733, %v810, -inf
        %814 = vmax.xlane.f32.xlu0 %v813
        %v815 = vpop.xlane.xlu0 %814
        %v816 = vsub.f32 %v810, %v815
        %v817 = vmul.f32 %v816, 1.442695
        %v818 = vpow.pop %v817
        %v819 = vsel %vm733, %v818, 0.0
        %820 = vadd.xlane.f32.xlu0 %v819
        %v821 = vpop.xlane.xlu0 %820
        %v822 = vrcp.pop %v821
        %v823 = vmul.f32 %v818, %v822
        %v824 = vpack.c.bf16 %v823, %v823
        %v825 = vld [vmem:[#allocation4] sm:$0xf]
        %v827 = vunpack.c.l.b16 %v825
        %v828 = vpack.c.b16 %v827, %v827
        %829 = vrot.lane.b32.xlu0 %v828, 120
        %v830 = vpop.permute.xlu0 %829
        %v832 = vsel %vm733, %v824, 0
        %v835 = vsel %vm737, %v830, 0
        %837 = vmatpush.bf16.msra.mxu0 0
        %838 = vmatpush.bf16.msra.mxu0 0
        %839 = vmatpush.bf16.msra.mxu0 0
        %840 = vmatpush.bf16.msra.mxu0 0
        %841 = vmatpush.bf16.msra.mxu0 0
        %842 = vmatpush.bf16.msra.mxu0 0
        %843 = vmatpush.bf16.msra.mxu0 0
        %844 = vmatpush.bf16.msra.mxu0 %v835
        %845 = vmatmul.bf16.gmra.mxu0 %v832
        %v846 = vpop.f32.mrf.mxu0
        %v847 = vadd.f32 0.0, %v846
        %v848 = vpop.f32.mrf.mxu0
        %849 = vdwg.mxu0
        %851 = vrot.lane.b32.xlu0 %v847, 8
        %v852 = vpop.permute.xlu0 %851
        %vm854 = vcmask 130112
        %855 = vst.msk [vmem:[#allocation5] sm:$0xff] %vm854, %v852
        %v856 = vld [vmem:[#allocation2] sm:$0xf]
        %v857 = vld [vmem:[#allocation3 + $0x8] sm:$0xf]
        %v859 = vunpack.c.l.b16 %v856
        %v860 = vpack.c.b16 %v859, %v859
        %861 = vrot.lane.b32.xlu0 %v860, 112
        %v862 = vpop.permute.xlu0 %861
        %v864 = vsel %vm733, %v862, 0
        %v867 = vsel %vm737, %v857, 0
        %869 = vmatpush.bf16.msra.mxu0 0
        %870 = vmatpush.bf16.msra.mxu0 0
        %871 = vmatpush.bf16.msra.mxu0 0
        %872 = vmatpush.bf16.msra.mxu0 0
        %873 = vmatpush.bf16.msra.mxu0 0
        %874 = vmatpush.bf16.msra.mxu0 0
        %875 = vmatpush.bf16.msra.mxu0 0
        %876 = vmatpush.bf16.msra.mxu0 %v867
        %877 = vmatmul.bf16.gmra.mxu0 %v864
        %v878 = vpop.f32.mrf.mxu0
        %v879 = vadd.f32 0.0, %v878
        %v880 = vpop.f32.mrf.mxu0
        %881 = vdwg.mxu0
        %v882 = vsel %vm733, %v879, -inf
        %883 = vmax.xlane.f32.xlu0 %v882
        %v884 = vpop.xlane.xlu0 %883
        %v885 = vsub.f32 %v879, %v884
        %v886 = vmul.f32 %v885, 1.442695
        %v887 = vpow.pop %v886
        %v888 = vsel %vm733, %v887, 0.0
        %889 = vadd.xlane.f32.xlu0 %v888
        %v890 = vpop.xlane.xlu0 %889
        %v891 = vrcp.pop %v890
        %v892 = vmul.f32 %v887, %v891
        %v893 = vpack.c.bf16 %v892, %v892
        %v894 = vld [vmem:[#allocation4] sm:$0xf]
        %v896 = vunpack.c.l.b16 %v894
        %v897 = vpack.c.b16 %v896, %v896
        %898 = vrot.lane.b32.xlu0 %v897, 112
        %v899 = vpop.permute.xlu0 %898
        %v901 = vsel %vm733, %v893, 0
        %v904 = vsel %vm737, %v899, 0
        %906 = vmatpush.bf16.msra.mxu0 0
        %907 = vmatpush.bf16.msra.mxu0 0
        %908 = vmatpush.bf16.msra.mxu0 0
        %909 = vmatpush.bf16.msra.mxu0 0
        %910 = vmatpush.bf16.msra.mxu0 0
        %911 = vmatpush.bf16.msra.mxu0 0
        %912 = vmatpush.bf16.msra.mxu0 0
        %913 = vmatpush.bf16.msra.mxu0 %v904
        %914 = vmatmul.bf16.gmra.mxu0 %v901
        %v915 = vpop.f32.mrf.mxu0
        %v916 = vadd.f32 0.0, %v915
        %v917 = vpop.f32.mrf.mxu0
        %918 = vdwg.mxu0
        %920 = vrot.lane.b32.xlu0 %v916, 16
        %v921 = vpop.permute.xlu0 %920
        %vm923 = vcmask 195712
        %924 = vst.msk [vmem:[#allocation5] sm:$0xff] %vm923, %v921
        %v925 = vld [vmem:[#allocation2] sm:$0xf]
        %v926 = vld [vmem:[#allocation3 + $0xc] sm:$0xf]
        %v928 = vunpack.c.l.b16 %v925
        %v929 = vpack.c.b16 %v928, %v928
        %930 = vrot.lane.b32.xlu0 %v929, 104
        %v931 = vpop.permute.xlu0 %930
        %v933 = vsel %vm733, %v931, 0
        %v936 = vsel %vm737, %v926, 0
        %938 = vmatpush.bf16.msra.mxu0 0
        %939 = vmatpush.bf16.msra.mxu0 0
        %940 = vmatpush.bf16.msra.mxu0 0
        %941 = vmatpush.bf16.msra.mxu0 0
        %942 = vmatpush.bf16.msra.mxu0 0
        %943 = vmatpush.bf16.msra.mxu0 0
        %944 = vmatpush.bf16.msra.mxu0 0
        %945 = vmatpush.bf16.msra.mxu0 %v936
        %946 = vmatmul.bf16.gmra.mxu0 %v933
        %v947 = vpop.f32.mrf.mxu0
        %v948 = vadd.f32 0.0, %v947
        %v949 = vpop.f32.mrf.mxu0
        %950 = vdwg.mxu0
        %v951 = vsel %vm733, %v948, -inf
        %952 = vmax.xlane.f32.xlu0 %v951
        %v953 = vpop.xlane.xlu0 %952
        %v954 = vsub.f32 %v948, %v953
        %v955 = vmul.f32 %v954, 1.442695
        %v956 = vpow.pop %v955
        %v957 = vsel %vm733, %v956, 0.0
        %958 = vadd.xlane.f32.xlu0 %v957
        %v959 = vpop.xlane.xlu0 %958
        %v960 = vrcp.pop %v959
        %v961 = vmul.f32 %v956, %v960
        %v962 = vpack.c.bf16 %v961, %v961
        %v963 = vld [vmem:[#allocation4] sm:$0xf]
        %v965 = vunpack.c.l.b16 %v963
        %v966 = vpack.c.b16 %v965, %v965
        %967 = vrot.lane.b32.xlu0 %v966, 104
        %v968 = vpop.permute.xlu0 %967
        %v970 = vsel %vm733, %v962, 0
        %v973 = vsel %vm737, %v968, 0
        %975 = vmatpush.bf16.msra.mxu0 0
        %976 = vmatpush.bf16.msra.mxu0 0
        %977 = vmatpush.bf16.msra.mxu0 0
        %978 = vmatpush.bf16.msra.mxu0 0
        %979 = vmatpush.bf16.msra.mxu0 0
        %980 = vmatpush.bf16.msra.mxu0 0
        %981 = vmatpush.bf16.msra.mxu0 0
        %982 = vmatpush.bf16.msra.mxu0 %v973
        %983 = vmatmul.bf16.gmra.mxu0 %v970
        %v984 = vpop.f32.mrf.mxu0
        %v985 = vadd.f32 0.0, %v984
        %v986 = vpop.f32.mrf.mxu0
        %987 = vdwg.mxu0
        %989 = vrot.lane.b32.xlu0 %v985, 24
        %v990 = vpop.permute.xlu0 %989
        %vm992 = vcmask 261312
        %993 = vst.msk [vmem:[#allocation5] sm:$0xff] %vm992, %v990
        %v994 = vld [vmem:[#allocation5] sm:$0xff]
        %v995 = vpack.c.bf16 %v994, %v994
        %v996 = vld [vmem:[#allocation17] sm:$0xf]
        %v997 = vld [vmem:[#allocation17 + $0x4] sm:$0xf]
        %v998 = vld [vmem:[#allocation17 + $0x8] sm:$0xf]
        %v999 = vld [vmem:[#allocation17 + $0xc] sm:$0xf]
        %v1000 = vld [vmem:[%s10] sm:$0x1]
        %v1002 = vperm.slane %v1000, 0
        %v1008 = vunpack.c.l.b16 %v996
        %v1009 = vunpack.c.l.b16 %v997
        %v1010 = vunpack.c.l.b16 %v998
        %v1011 = vunpack.c.l.b16 %v999
        %v1012 = vpack.c.b16 %v1009, %v1008
        %v1013 = vpack.c.b16 %v1011, %v1010
        %v1017 = vsel %vm710, %v995, 0
        %1019 = vmatpush.bf16.msra.mxu0 0
        %1020 = vmatpush.bf16.msra.mxu0 0
        %1021 = vmatpush.bf16.msra.mxu0 0
        %1022 = vmatpush.bf16.msra.mxu0 0
        %1023 = vmatpush.bf16.msra.mxu0 0
        %1024 = vmatpush.bf16.msra.mxu0 0
        %1025 = vmatpush.bf16.msra.mxu0 %v1013
        %1026 = vmatpush.bf16.msra.mxu0 %v1012
        %1027 = vmatmul.bf16.gmra.mxu0 %v1017
        %v1028 = vpop.f32.mrf.mxu0
        %v1029 = vadd.f32 %v1002, %v1028
        %v1030 = vpop.f32.mrf.mxu0
        %1031 = vdwg.mxu0
        %1032 = vst.msk [vmem:[%s561] sm:$0xff] %vm710, %v1029
        %s1033 = sand.u32 %s303, 1
        %s1034 = scalar_lea.sflag [#allocation8], %s1033
        %s1035 = sand.u32 %s303, 1
        %s1036 = smul.addr %s1035, 8
        %s1037 = scalar_lea.vmem [#allocation18], %s1036
        // Predicated region
        $region97: #{tpu_custom_call.1} parent=63 // pred_check
          %p1038 = pneg %p313
        $region98: #{tpu_custom_call.1} parent=63 // pred_check_branch
          %1040 = sbr.rel (%p1038) target = $region100
        $region99: #{tpu_custom_call.1} parent=63 // pred_region
          %1042 = vsyncadd %s1034, 0
          %s1043 = sadd.s32 %s38, %s37
          %s1044 = smul.addr %s1043, 8
          %s1045 = scalar_lea.hbm %s11, %s1044
          %s1047 = sshll.u32 %s1037, 4
          %s1048 = int_to_ptr.vmem [resolvable:$true] %s1047
          %s1049 = sshll.u32 %s1045, 4
          %s1050 = int_to_ptr.hbm [resolvable:$true] %s1049
          %1052 = dma.vmem_to_hbm [thread:$0]  %s1048, 128, %s1050, %s1034
        $region100: #{tpu_custom_call.1} parent=63 // pred_fallthru
          _
      $region64: #{tpu_custom_call.1} parent=5 // pred_fallthru
        _
      %p1053 = scmp.le.s32.totalorder 2, %s28
      // Predicated region
      $region101: #{tpu_custom_call.1} parent=5 // pred_check
        %p1054 = pneg %p1053
      $region102: #{tpu_custom_call.1} parent=5 // pred_check_branch
        %1056 = sbr.rel (%p1054) target = $region104
      $region103: #{tpu_custom_call.1} parent=5 // pred_region
        %s1057 = ssub.s32 %s28, 2
        // Predicated region
        $region105: #{tpu_custom_call.1} parent=103 // pred_check
          %p1058 = pneg %p319
        $region106: #{tpu_custom_call.1} parent=103 // pred_check_branch
          %1060 = sbr.rel (%p1058) target = $region108
        $region107: #{tpu_custom_call.1} parent=103 // pred_region
          %s1061 = sand.u32 %s304, 1
          %s1062 = scalar_lea.sflag [#allocation8], %s1061
          %s1063 = sand.u32 %s304, 1
          %s1064 = smul.addr %s1063, 8
          %s1065 = scalar_lea.vmem [#allocation18], %s1064
          %1067 = dma.done %s1062, 128
        $region108: #{tpu_custom_call.1} parent=103 // pred_fallthru
          _
      $region104: #{tpu_custom_call.1} parent=5 // pred_fallthru
        _
    $region6: #{tpu_custom_call.1} parent=1 // loop_footer
      %s32 = sadd.s32 1, %s28
    $region7: #{tpu_custom_call.1} parent=1 // loop_footer_branch
      %27 = sbr.rel target = $region3
    $region8: #{tpu_custom_call.1} parent=1 // loop_exit
      _
    %1068 = vsyncpa [#allocation7], 1
    %s1069 = scalar_lea.sflag [#allocation7], 1
    %1070 = vsyncpa %s1069, 1
    %1071 = vsyncpa [#allocation10], 1
    %s1072 = scalar_lea.sflag [#allocation10], 1
    %1073 = vsyncpa %s1072, 1
    %1074 = vsyncpa [#allocation13], 1
    %1075 = vsyncpa [#allocation16], 1
    %1076 = vsyncpa [#allocation8], 1
    %s1077 = scalar_lea.sflag [#allocation8], 1
    %1078 = vsyncpa %s1077, 1

</llo_original>
